<compile_context>
chip_gen: v6e
topology: v6e:2x2x1
jax: 0.10.0
libtpu: 0.0.40
codegen_flags: <defaults>
</compile_context>

<pallas_src>
import functools

import jax
import jax.numpy as jnp
from jax.experimental import pallas as pl
from jax.experimental.pallas import tpu as pltpu


# ----------------------------- Pallas kernel --------------------------------
def interaction_proj_kernel(
    x_ref,      # (TM, d_in)     f32   concat([positive_emb, fourier_xyxy]) rows
    m_ref,      # (TM, 1)        f32   mask per row (0 for pad rows)
    null_ref,   # (1, d_in)      f32   concat([null_feature, null_position])
    w1_ref,     # (d_in, 512)    bf16
    b1_ref,     # (1, 512)       f32
    w2_ref,     # (512, 512)     bf16
    b2_ref,     # (1, 512)       f32
    w3_ref,     # (512, out_dim) bf16
    bias_ref,   # (TM, out_dim)  f32   interaction_emb + position_emb + b3
    o_ref,      # (TM, out_dim)  f32
):
    nul = null_ref[...]                                    # (1, d_in)
    m = m_ref[...]                                         # (TM, 1)

    # mask blend:  null + m * (x - null)   (== m*x + (1-m)*null)
    x = (nul + m * (x_ref[...] - nul)).astype(jnp.bfloat16)

    # Linear1 + SiLU
    h = jnp.dot(x, w1_ref[...], preferred_element_type=jnp.float32) + b1_ref[...]
    h = h * jax.nn.sigmoid(h)

    # Linear2 + SiLU
    h = jnp.dot(h.astype(jnp.bfloat16), w2_ref[...],
                preferred_element_type=jnp.float32) + b2_ref[...]
    h = h * jax.nn.sigmoid(h)

    # Linear3 (bias folded into epilogue bias) + fused epilogue add
    h = jnp.dot(h.astype(jnp.bfloat16), w3_ref[...],
                preferred_element_type=jnp.float32)
    o_ref[...] = (h + bias_ref[...]).astype(o_ref.dtype)


def run_fused(x_all, mask_all, null_all, w1, b1, w2, b2, w3, bias_all):
    S, TM, d_in = x_all.shape           # S == 2 weight sets, TM == 2*B*N rows
    hid = w2.shape[-1]
    out_dim = w3.shape[-1]

    per_set = lambda s: (s, 0, 0)       # everything is selected by weight set

    in_specs = [
        pl.BlockSpec((None, TM, d_in), per_set),       # x slab
        pl.BlockSpec((None, TM, 1), per_set),          # mask
        pl.BlockSpec((None, 1, d_in), per_set),        # null row
        pl.BlockSpec((None, d_in, hid), per_set),      # w1
        pl.BlockSpec((None, 1, hid), per_set),         # b1
        pl.BlockSpec((None, hid, hid), per_set),       # w2
        pl.BlockSpec((None, 1, hid), per_set),         # b2
        pl.BlockSpec((None, hid, out_dim), per_set),   # w3
        pl.BlockSpec((None, TM, out_dim), per_set),    # epilogue bias
    ]
    out_spec = pl.BlockSpec((None, TM, out_dim), per_set)

    return pl.pallas_call(
        interaction_proj_kernel,
        out_shape=jax.ShapeDtypeStruct((S, TM, out_dim), jnp.float32),
        grid=(S,),
        in_specs=in_specs,
        out_specs=out_spec,
        compiler_params=pltpu.CompilerParams(
            dimension_semantics=("parallel",)),   # balanced 2-way split on v7x
    )(x_all, mask_all, null_all, w1, b1, w2, b2, w3, bias_all)


# ------------------------------- JAX glue ------------------------------------
def get_fourier_embeds_from_boundingbox(embed_dim, box):
    # box: [B, N, 4] -> [B, N, embed_dim * 2 * 4]
    B, N = box.shape[:2]
    emb = 100.0 ** (jnp.arange(embed_dim, dtype=box.dtype) / embed_dim)
    emb = emb[None, None, None, :] * box[..., None]               # [B,N,4,ed]
    emb = jnp.stack([jnp.sin(emb), jnp.cos(emb)], axis=-1)        # [B,N,4,ed,2]
    emb = jnp.transpose(emb, (0, 1, 3, 4, 2)).reshape(B, N, embed_dim * 2 * 4)
    return emb


def get_between_box(bbox1, bbox2):
    all_x = jnp.concatenate([bbox1[:, :, 0::2], bbox2[:, :, 0::2]], axis=-1)
    all_y = jnp.concatenate([bbox1[:, :, 1::2], bbox2[:, :, 1::2]], axis=-1)
    all_x = jnp.sort(all_x, axis=-1)
    all_y = jnp.sort(all_y, axis=-1)
    return jnp.stack(
        [all_x[:, :, 1], all_y[:, :, 1], all_x[:, :, 2], all_y[:, :, 2]], axis=2
    )


def init_params(key, in_dim, out_dim, fourier_freqs=8):
    pos_dim = fourier_freqs * 2 * 4
    d_in = in_dim + pos_dim
    ks = jax.random.split(key, 8)
    std = 0.02

    def lin(k, fan_in, fan_out):
        kw, kb = jax.random.split(k)
        w = jax.random.normal(kw, (fan_in, fan_out), jnp.float32) * std
        b = jax.random.normal(kb, (1, fan_out), jnp.float32) * std
        return w, b

    p = {}
    p["lin1_w"], p["lin1_b"] = lin(ks[0], d_in, 512)
    p["lin2_w"], p["lin2_b"] = lin(ks[1], 512, 512)
    p["lin3_w"], p["lin3_b"] = lin(ks[2], 512, out_dim)
    p["act1_w"], p["act1_b"] = lin(ks[3], d_in, 512)
    p["act2_w"], p["act2_b"] = lin(ks[4], 512, 512)
    p["act3_w"], p["act3_b"] = lin(ks[5], 512, out_dim)
    p["interaction_emb"] = jax.random.normal(ks[6], (32, out_dim), jnp.float32) * std
    p["position_emb"] = jax.random.normal(ks[7], (3, out_dim), jnp.float32) * std
    p["null_positive"] = jnp.zeros((1, in_dim), jnp.float32)
    p["null_action"] = jnp.zeros((1, in_dim), jnp.float32)
    p["null_position"] = jnp.zeros((1, pos_dim), jnp.float32)
    return p


def prepare_params(params):
    """One-time parameter prep: stacking + bf16 cast hoisted off the per-call path."""
    bf = jnp.bfloat16
    null0 = jnp.concatenate([params["null_positive"], params["null_position"]], -1)
    null1 = jnp.concatenate([params["null_action"], params["null_position"]], -1)
    return {
        "w1": jnp.stack([params["lin1_w"], params["act1_w"]]).astype(bf),
        "b1": jnp.stack([params["lin1_b"], params["act1_b"]]),
        "w2": jnp.stack([params["lin2_w"], params["act2_w"]]).astype(bf),
        "b2": jnp.stack([params["lin2_b"], params["act2_b"]]),
        "w3": jnp.stack([params["lin3_w"], params["act3_w"]]).astype(bf),
        "b3_lin": params["lin3_b"],
        "b3_act": params["act3_b"],
        "null": jnp.stack([null0, null1]),               # (2, 1, d_in)
        "interaction_emb": params["interaction_emb"],    # (32, out)
        "position_emb": params["position_emb"],          # (3, out)
    }


@functools.partial(jax.jit, static_argnums=(7,))
def forward(prepped, subject_boxes, object_boxes, masks,
            subject_pos_emb, object_pos_emb, action_pos_emb, fourier_freqs=8):
    B, N, in_dim = subject_pos_emb.shape
    pos_dim = fourier_freqs * 2 * 4
    d_in = in_dim + pos_dim
    out_dim = prepped["w3"].shape[-1]
    assert N <= prepped["interaction_emb"].shape[0], "N exceeds max_seq_len=32"
    assert prepped["w1"].shape[1] == d_in

    action_boxes = get_between_box(subject_boxes, object_boxes)
    subj_xyxy = get_fourier_embeds_from_boundingbox(fourier_freqs, subject_boxes)
    obj_xyxy = get_fourier_embeds_from_boundingbox(fourier_freqs, object_boxes)
    act_xyxy = get_fourier_embeds_from_boundingbox(fourier_freqs, action_boxes)

    # ---- pack folded row slabs: weight set 0 = [subject ; object],
    #                             weight set 1 = [action  ; zero-pad] ----------
    def cat_rows(feat, xyxy):
        return jnp.concatenate([feat, xyxy], -1).reshape(B * N, d_in)

    x_subj = cat_rows(subject_pos_emb, subj_xyxy)
    x_obj = cat_rows(object_pos_emb, obj_xyxy)
    x_act = cat_rows(action_pos_emb, act_xyxy)
    pad_x = jnp.zeros_like(x_act)
    x_all = jnp.stack([jnp.concatenate([x_subj, x_obj], 0),
                       jnp.concatenate([x_act, pad_x], 0)], 0)     # (2, 2BN, d_in)

    mflat = masks.astype(jnp.float32).reshape(B * N, 1)
    pad_m = jnp.zeros_like(mflat)
    mask_all = jnp.stack([jnp.concatenate([mflat, mflat], 0),
                          jnp.concatenate([mflat, pad_m], 0)], 0)  # (2, 2BN, 1)

    # ---- per-row epilogue bias: interaction_emb[n] + position_emb[stream] + b3
    inter = prepped["interaction_emb"][:N]                         # (N, out)
    pos = prepped["position_emb"]                                  # (3, out)
    b3s = jnp.stack([prepped["b3_lin"], prepped["b3_lin"], prepped["b3_act"]])
    stream_bias = inter[None, :, :] + pos[:, None, :] + b3s        # (3, N, out)
    stream_bias = jnp.broadcast_to(
        stream_bias[:, None], (3, B, N, out_dim)).reshape(3, B * N, out_dim)
    pad_b = jnp.zeros((B * N, out_dim), jnp.float32)
    bias_all = jnp.stack(
        [jnp.concatenate([stream_bias[0], stream_bias[1]], 0),     # subj | obj
         jnp.concatenate([stream_bias[2], pad_b], 0)], 0)          # act  | pad

    out = run_fused(x_all, mask_all, prepped["null"],
                    prepped["w1"], prepped["b1"], prepped["w2"], prepped["b2"],
                    prepped["w3"], bias_all)                       # (2, 2BN, out)

    # ---- rearrange to [B, 3N, out] = [subject | action | object] -------------
    so = out[0].reshape(2, B, N, out_dim)
    subj, obj = so[0], so[1]
    act = out[1, :B * N].reshape(B, N, out_dim)
    return jnp.concatenate([subj, act, obj], axis=1)


# ------------------------- pure-JAX reference (check) ------------------------
def reference_forward(params, subject_boxes, object_boxes, masks,
                      subject_pos_emb, object_pos_emb, action_pos_emb,
                      fourier_freqs=8):
    B, N, in_dim = subject_pos_emb.shape
    m = masks[..., None].astype(jnp.float32)
    action_boxes = get_between_box(subject_boxes, object_boxes)
    subj_xyxy = get_fourier_embeds_from_boundingbox(fourier_freqs, subject_boxes)
    obj_xyxy = get_fourier_embeds_from_boundingbox(fourier_freqs, object_boxes)
    act_xyxy = get_fourier_embeds_from_boundingbox(fourier_freqs, action_boxes)

    pn = params["null_positive"][None]; xn = params["null_position"][None]
    an = params["null_action"][None]
    s_f = subject_pos_emb * m + (1 - m) * pn
    o_f = object_pos_emb * m + (1 - m) * pn
    a_f = action_pos_emb * m + (1 - m) * an
    s_x = subj_xyxy * m + (1 - m) * xn
    o_x = obj_xyxy * m + (1 - m) * xn
    a_x = act_xyxy * m + (1 - m) * xn

    def silu(x): return x * jax.nn.sigmoid(x)

    def mlp(x, pfx):
        h = silu(x @ params[pfx + "1_w"] + params[pfx + "1_b"])
        h = silu(h @ params[pfx + "2_w"] + params[pfx + "2_b"])
        return h @ params[pfx + "3_w"] + params[pfx + "3_b"]

    s = mlp(jnp.concatenate([s_f, s_x], -1), "lin")
    o = mlp(jnp.concatenate([o_f, o_x], -1), "lin")
    a = mlp(jnp.concatenate([a_f, a_x], -1), "act")

    inter = params["interaction_emb"][:N][None]
    s = s + inter + params["position_emb"][0]
    o = o + inter + params["position_emb"][1]
    a = a + inter + params["position_emb"][2]
    return jnp.concatenate([s, a, o], axis=1)


# ---------------------------------- main -------------------------------------
if __name__ == "__main__":
    B, N = 2, 8
    in_dim, out_dim, fourier_freqs = 32, 128, 8   # out_dim multiple of 128 -> lane-dense store

    key = jax.random.PRNGKey(0)
    kp, k1, k2, k3, k4, k5, k6 = jax.random.split(key, 7)

    params = init_params(kp, in_dim, out_dim, fourier_freqs)
    prepped = prepare_params(params)              # one-time weight stack + bf16 cast

    subject_boxes = jax.random.uniform(k1, (B, N, 4), jnp.float32)
    object_boxes = jax.random.uniform(k2, (B, N, 4), jnp.float32)
    masks = jax.random.bernoulli(k3, 0.7, (B, N)).astype(jnp.float32)
    subject_pos_emb = jax.random.normal(k4, (B, N, in_dim), jnp.float32)
    object_pos_emb = jax.random.normal(k5, (B, N, in_dim), jnp.float32)
    action_pos_emb = jax.random.normal(k6, (B, N, in_dim), jnp.float32)

    out = forward(prepped, subject_boxes, object_boxes, masks,
                  subject_pos_emb, object_pos_emb, action_pos_emb, fourier_freqs)
    out = jax.block_until_ready(out)

    ref = reference_forward(params, subject_boxes, object_boxes, masks,
                            subject_pos_emb, object_pos_emb, action_pos_emb,
                            fourier_freqs)
    assert out.shape == (B, 3 * N, out_dim), out.shape
    # bf16 matmul operands (f32 accumulation) -> relaxed tolerance vs f32 ref.
    err = float(jnp.abs(out - ref).max())
    assert jnp.allclose(out, ref, atol=2e-2, rtol=2e-2), err

    print("KERNEL_OK")
</pallas_src>

<mosaic_0001>
module attributes {stable_mosaic.version = 11 : i64} {
  func.func @interaction_proj_kernel(%arg0: i32, %arg1: memref<1x32x96xf32, #tpu.memory_space<vmem>>, %arg2: memref<1x32x1xf32, #tpu.memory_space<vmem>>, %arg3: memref<1x1x96xf32, #tpu.memory_space<vmem>>, %arg4: memref<1x96x512xbf16, #tpu.memory_space<vmem>>, %arg5: memref<1x1x512xf32, #tpu.memory_space<vmem>>, %arg6: memref<1x512x512xbf16, #tpu.memory_space<vmem>>, %arg7: memref<1x1x512xf32, #tpu.memory_space<vmem>>, %arg8: memref<1x512x128xbf16, #tpu.memory_space<vmem>>, %arg9: memref<1x32x128xf32, #tpu.memory_space<vmem>>, %arg10: memref<1x32x128xf32, #tpu.memory_space<vmem>>) attributes {dimension_semantics = [#tpu.dimension_semantics<parallel>], iteration_bounds = array<i64: 2>, scalar_prefetch = 0 : i64, scratch_operands = 0 : i64, tpu.core_type = #tpu.core_type<tc>, window_params = [{transform_indices = @transform_0, window_bounds = array<i64: 1, 32, 96>}, {transform_indices = @transform_1, window_bounds = array<i64: 1, 32, 1>}, {transform_indices = @transform_2, window_bounds = array<i64: 1, 1, 96>}, {transform_indices = @transform_3, window_bounds = array<i64: 1, 96, 512>}, {transform_indices = @transform_4, window_bounds = array<i64: 1, 1, 512>}, {transform_indices = @transform_5, window_bounds = array<i64: 1, 512, 512>}, {transform_indices = @transform_6, window_bounds = array<i64: 1, 1, 512>}, {transform_indices = @transform_7, window_bounds = array<i64: 1, 512, 128>}, {transform_indices = @transform_8, window_bounds = array<i64: 1, 32, 128>}, {transform_indices = @transform_9, window_bounds = array<i64: 1, 32, 128>}]} {
    %c0 = arith.constant 0 : index
    %c0_0 = arith.constant 0 : index
    %c0_1 = arith.constant 0 : index
    %0 = vector.load %arg3[%c0, %c0_0, %c0_1] : memref<1x1x96xf32, #tpu.memory_space<vmem>>, vector<1x1x96xf32>
    %1 = vector.shape_cast %0 : vector<1x1x96xf32> to vector<1x96xf32>
    %c0_2 = arith.constant 0 : index
    %c0_3 = arith.constant 0 : index
    %c0_4 = arith.constant 0 : index
    %2 = vector.load %arg2[%c0_2, %c0_3, %c0_4] : memref<1x32x1xf32, #tpu.memory_space<vmem>>, vector<1x32x1xf32>
    %3 = vector.shape_cast %2 : vector<1x32x1xf32> to vector<32x1xf32>
    %c0_5 = arith.constant 0 : index
    %c0_6 = arith.constant 0 : index
    %c0_7 = arith.constant 0 : index
    %4 = vector.load %arg1[%c0_5, %c0_6, %c0_7] : memref<1x32x96xf32, #tpu.memory_space<vmem>>, vector<1x32x96xf32>
    %5 = vector.shape_cast %4 : vector<1x32x96xf32> to vector<32x96xf32>
    %6 = vector.broadcast %1 : vector<1x96xf32> to vector<32x96xf32>
    %7 = arith.subf %5, %6 : vector<32x96xf32>
    %8 = vector.broadcast %3 : vector<32x1xf32> to vector<32x96xf32>
    %9 = arith.mulf %8, %7 : vector<32x96xf32>
    %10 = vector.broadcast %1 : vector<1x96xf32> to vector<32x96xf32>
    %11 = arith.addf %10, %9 : vector<32x96xf32>
    %12 = arith.truncf %11 : vector<32x96xf32> to vector<32x96xbf16>
    %c0_8 = arith.constant 0 : index
    %c0_9 = arith.constant 0 : index
    %c0_10 = arith.constant 0 : index
    %13 = vector.load %arg4[%c0_8, %c0_9, %c0_10] : memref<1x96x512xbf16, #tpu.memory_space<vmem>>, vector<1x96x512xbf16>
    %14 = vector.shape_cast %13 : vector<1x96x512xbf16> to vector<96x512xbf16>
    %cst = arith.constant dense<0.000000e+00> : vector<32x512xf32>
    %15 = tpu.matmul %12, %14, %cst {dimension_numbers = #tpu.dot_dimension_numbers<[1], [0], [0], [1], [0, 0, 1, 1], [], []>} : vector<32x96xbf16>, vector<96x512xbf16>, vector<32x512xf32> -> vector<32x512xf32>
    %c0_11 = arith.constant 0 : index
    %c0_12 = arith.constant 0 : index
    %c0_13 = arith.constant 0 : index
    %16 = vector.load %arg5[%c0_11, %c0_12, %c0_13] : memref<1x1x512xf32, #tpu.memory_space<vmem>>, vector<1x1x512xf32>
    %17 = vector.shape_cast %16 : vector<1x1x512xf32> to vector<1x512xf32>
    %18 = vector.broadcast %17 : vector<1x512xf32> to vector<32x512xf32>
    %19 = arith.addf %15, %18 : vector<32x512xf32>
    %20 = arith.negf %19 : vector<32x512xf32>
    %21 = math.exp %20 : vector<32x512xf32>
    %cst_14 = arith.constant 1.000000e+00 : f32
    %22 = vector.broadcast %cst_14 : f32 to vector<32x512xf32>
    %23 = arith.addf %22, %21 : vector<32x512xf32>
    %24 = arith.divf %22, %23 : vector<32x512xf32>
    %25 = arith.mulf %19, %24 : vector<32x512xf32>
    %26 = arith.truncf %25 : vector<32x512xf32> to vector<32x512xbf16>
    %c0_15 = arith.constant 0 : index
    %c0_16 = arith.constant 0 : index
    %c0_17 = arith.constant 0 : index
    %27 = vector.load %arg6[%c0_15, %c0_16, %c0_17] : memref<1x512x512xbf16, #tpu.memory_space<vmem>>, vector<1x512x512xbf16>
    %28 = vector.shape_cast %27 : vector<1x512x512xbf16> to vector<512x512xbf16>
    %cst_18 = arith.constant dense<0.000000e+00> : vector<32x512xf32>
    %29 = tpu.matmul %26, %28, %cst_18 {dimension_numbers = #tpu.dot_dimension_numbers<[1], [0], [0], [1], [0, 0, 1, 1], [], []>} : vector<32x512xbf16>, vector<512x512xbf16>, vector<32x512xf32> -> vector<32x512xf32>
    %c0_19 = arith.constant 0 : index
    %c0_20 = arith.constant 0 : index
    %c0_21 = arith.constant 0 : index
    %30 = vector.load %arg7[%c0_19, %c0_20, %c0_21] : memref<1x1x512xf32, #tpu.memory_space<vmem>>, vector<1x1x512xf32>
    %31 = vector.shape_cast %30 : vector<1x1x512xf32> to vector<1x512xf32>
    %32 = vector.broadcast %31 : vector<1x512xf32> to vector<32x512xf32>
    %33 = arith.addf %29, %32 : vector<32x512xf32>
    %34 = arith.negf %33 : vector<32x512xf32>
    %35 = math.exp %34 : vector<32x512xf32>
    %cst_22 = arith.constant 1.000000e+00 : f32
    %36 = vector.broadcast %cst_22 : f32 to vector<32x512xf32>
    %37 = arith.addf %36, %35 : vector<32x512xf32>
    %38 = arith.divf %36, %37 : vector<32x512xf32>
    %39 = arith.mulf %33, %38 : vector<32x512xf32>
    %40 = arith.truncf %39 : vector<32x512xf32> to vector<32x512xbf16>
    %c0_23 = arith.constant 0 : index
    %c0_24 = arith.constant 0 : index
    %c0_25 = arith.constant 0 : index
    %41 = vector.load %arg8[%c0_23, %c0_24, %c0_25] : memref<1x512x128xbf16, #tpu.memory_space<vmem>>, vector<1x512x128xbf16>
    %42 = vector.shape_cast %41 : vector<1x512x128xbf16> to vector<512x128xbf16>
    %cst_26 = arith.constant dense<0.000000e+00> : vector<32x128xf32>
    %43 = tpu.matmul %40, %42, %cst_26 {dimension_numbers = #tpu.dot_dimension_numbers<[1], [0], [0], [1], [0, 0, 1, 1], [], []>} : vector<32x512xbf16>, vector<512x128xbf16>, vector<32x128xf32> -> vector<32x128xf32>
    %c0_27 = arith.constant 0 : index
    %c0_28 = arith.constant 0 : index
    %c0_29 = arith.constant 0 : index
    %44 = vector.load %arg9[%c0_27, %c0_28, %c0_29] : memref<1x32x128xf32, #tpu.memory_space<vmem>>, vector<1x32x128xf32>
    %45 = vector.shape_cast %44 : vector<1x32x128xf32> to vector<32x128xf32>
    %46 = arith.addf %43, %45 : vector<32x128xf32>
    %c0_30 = arith.constant 0 : index
    %c0_31 = arith.constant 0 : index
    %c0_32 = arith.constant 0 : index
    %47 = vector.load %arg10[%c0_30, %c0_31, %c0_32] : memref<1x32x128xf32, #tpu.memory_space<vmem>>, vector<1x32x128xf32>
    %48 = vector.shape_cast %47 : vector<1x32x128xf32> to vector<32x128xf32>
    %49 = vector.shape_cast %46 : vector<32x128xf32> to vector<1x32x128xf32>
    tpu.vector_store %arg10[%c0_30, %c0_31, %c0_32], %49 {strides = array<i32>} : memref<1x32x128xf32, #tpu.memory_space<vmem>>, vector<1x32x128xf32>,
    return
  }
  func.func @transform_0(%arg0: i32) -> (i32, i32, i32) {
    %c0_i32 = arith.constant 0 : i32
    %c0_i32_0 = arith.constant 0 : i32
    %c0_i32_1 = arith.constant 0 : i32
    return %arg0, %c0_i32, %c0_i32_0 : i32, i32, i32
  }
  func.func @transform_1(%arg0: i32) -> (i32, i32, i32) {
    %c0_i32 = arith.constant 0 : i32
    %c0_i32_0 = arith.constant 0 : i32
    %c0_i32_1 = arith.constant 0 : i32
    return %arg0, %c0_i32, %c0_i32_0 : i32, i32, i32
  }
  func.func @transform_2(%arg0: i32) -> (i32, i32, i32) {
    %c0_i32 = arith.constant 0 : i32
    %c0_i32_0 = arith.constant 0 : i32
    %c0_i32_1 = arith.constant 0 : i32
    return %arg0, %c0_i32, %c0_i32_0 : i32, i32, i32
  }
  func.func @transform_3(%arg0: i32) -> (i32, i32, i32) {
    %c0_i32 = arith.constant 0 : i32
    %c0_i32_0 = arith.constant 0 : i32
    %c0_i32_1 = arith.constant 0 : i32
    return %arg0, %c0_i32, %c0_i32_0 : i32, i32, i32
  }
  func.func @transform_4(%arg0: i32) -> (i32, i32, i32) {
    %c0_i32 = arith.constant 0 : i32
    %c0_i32_0 = arith.constant 0 : i32
    %c0_i32_1 = arith.constant 0 : i32
    return %arg0, %c0_i32, %c0_i32_0 : i32, i32, i32
  }
  func.func @transform_5(%arg0: i32) -> (i32, i32, i32) {
    %c0_i32 = arith.constant 0 : i32
    %c0_i32_0 = arith.constant 0 : i32
    %c0_i32_1 = arith.constant 0 : i32
    return %arg0, %c0_i32, %c0_i32_0 : i32, i32, i32
  }
  func.func @transform_6(%arg0: i32) -> (i32, i32, i32) {
    %c0_i32 = arith.constant 0 : i32
    %c0_i32_0 = arith.constant 0 : i32
    %c0_i32_1 = arith.constant 0 : i32
    return %arg0, %c0_i32, %c0_i32_0 : i32, i32, i32
  }
  func.func @transform_7(%arg0: i32) -> (i32, i32, i32) {
    %c0_i32 = arith.constant 0 : i32
    %c0_i32_0 = arith.constant 0 : i32
    %c0_i32_1 = arith.constant 0 : i32
    return %arg0, %c0_i32, %c0_i32_0 : i32, i32, i32
  }
  func.func @transform_8(%arg0: i32) -> (i32, i32, i32) {
    %c0_i32 = arith.constant 0 : i32
    %c0_i32_0 = arith.constant 0 : i32
    %c0_i32_1 = arith.constant 0 : i32
    return %arg0, %c0_i32, %c0_i32_0 : i32, i32, i32
  }
  func.func @transform_9(%arg0: i32) -> (i32, i32, i32) {
    %c0_i32 = arith.constant 0 : i32
    %c0_i32_0 = arith.constant 0 : i32
    %c0_i32_1 = arith.constant 0 : i32
    return %arg0, %c0_i32, %c0_i32_0 : i32, i32, i32
  }
}

</mosaic_0001>

<llo_original>
// kernel: forward.1
$region0: #{forward.1}
  #allocation0 [shape = 'u32[]', space=smem, size = 0x4, offset = 0x4, fixed_abs, tag = 'smem constant byte address 0x4 - core index']
  #allocation1 [shape = 'u32[144,128]{1,0:T(1,128)}', space=vmem, size = 0x12000, scoped, tag = 'internal scratch']
  %s0 = inlined_call_operand.vmem [shape: f32[2,32,96], index: 0, kind: input, shape index: {}]
  %s1 = inlined_call_operand.vmem [shape: f32[2,32,1], index: 1, kind: input, shape index: {}]
  %s2 = inlined_call_operand.vmem [shape: f32[2,1,96], index: 2, kind: input, shape index: {}]
  %s3 = inlined_call_operand.vmem [shape: bf16[2,96,512], index: 3, kind: input, shape index: {}]
  %s4 = inlined_call_operand.vmem [shape: f32[2,1,512], index: 4, kind: input, shape index: {}]
  %s5 = inlined_call_operand.vmem [shape: bf16[2,512,512], index: 5, kind: input, shape index: {}]
  %s6 = inlined_call_operand.vmem [shape: f32[2,1,512], index: 6, kind: input, shape index: {}]
  %s7 = inlined_call_operand.vmem [shape: bf16[2,512,128], index: 7, kind: input, shape index: {}]
  %s8 = inlined_call_operand.vmem [shape: f32[2,32,128], index: 8, kind: input, shape index: {}]
  %s9 = inlined_call_operand.vmem [shape: f32[2,32,128], index: 9, kind: output, shape index: {}]
  %s10 = sld [smem:[#allocation0]]
  $region69: #{forward.1} parent=0
    _
  %s12 = ssub.s32 1, %s10
  %s13 = scalar_select 0, %s12, %s10
  loop: start=0, step=1, limit=4
  $region2: #{forward.1} parent=0 // loop_pre_header
    _
  $region3: #{forward.1} parent=0 // loop_header
    %s15 = sphi 0, %s19
    %p16 = scmp.ge.s32.totalorder %s15, 4
    %s25 = sphi 0, %s27
    %s28 = sphi 0, %s25
    %s29 = sphi 0, %s28
    %s45 = sphi 0, %s29
    %s51 = sphi 0, %s53
    %s54 = sphi 0, %s51
    %s55 = sphi 0, %s54
    %s71 = sphi 0, %s55
    %s77 = sphi 0, %s79
    %s80 = sphi 0, %s77
    %s81 = sphi 0, %s80
    %s97 = sphi 0, %s81
    %s103 = sphi 0, %s105
    %s106 = sphi 0, %s103
    %s107 = sphi 0, %s106
    %s123 = sphi 0, %s107
    %s129 = sphi 0, %s131
    %s132 = sphi 0, %s129
    %s133 = sphi 0, %s132
    %s149 = sphi 0, %s133
    %s155 = sphi 0, %s157
    %s158 = sphi 0, %s155
    %s159 = sphi 0, %s158
    %s175 = sphi 0, %s159
    %s181 = sphi 0, %s183
    %s184 = sphi 0, %s181
    %s185 = sphi 0, %s184
    %s201 = sphi 0, %s185
    %s207 = sphi 0, %s209
    %s210 = sphi 0, %s207
    %s211 = sphi 0, %s210
    %s227 = sphi 0, %s211
    %s233 = sphi 0, %s235
    %s236 = sphi 0, %s233
    %s237 = sphi 0, %s236
    %s253 = sphi 0, %s237
    %s259 = sphi 0, %s261
    %s262 = sphi 0, %s259
    %s263 = sphi 0, %s262
    %s279 = sphi 0, %s263
  $region4: #{forward.1} parent=0 // loop_header_branch
    %18 = sbr.rel (%p16) target = $region8
  $region5: #{forward.1} parent=0 // loop_body
    %s20 = ssub.s32 %s15, 1
    %s21 = ssub.s32 %s15, 2
    %s22 = sadd.s32 %s15, 1
    %s23 = ssub.s32 %s15, %s22
    %p24 = scmp.eq.s32.totalorder %s23, 0
    %s26 = sadd.s32 %s25, 1
    %s27 = scalar_select %p24, %s25, %s26
    %p30 = pneg %p24
    %p31 = scmp.eq.s32.totalorder %s15, 1
    %p32 = por %p30, %p31
    %p33 = scmp.ne.s32.totalorder %s25, %s28
    %p34 = scmp.eq.s32.totalorder %s15, 0
    %p35 = por %p33, %p34
    %p36 = scmp.ne.s32.totalorder %s25, %s28
    %p37 = scmp.eq.s32.totalorder %s20, 1
    %p38 = por %p36, %p37
    %p39 = scmp.ne.s32.totalorder %s28, %s29
    %p40 = scmp.eq.s32.totalorder %s20, 0
    %p41 = por %p39, %p40
    %p42 = scmp.ne.s32.totalorder %s28, %s29
    %p43 = scmp.eq.s32.totalorder %s21, 1
    %p44 = por %p42, %p43
    %p46 = scmp.ne.s32.totalorder %s29, %s45
    %p47 = scmp.eq.s32.totalorder %s21, 0
    %p48 = por %p46, %p47
    %s49 = ssub.s32 %s15, %s22
    %p50 = scmp.eq.s32.totalorder %s49, 0
    %s52 = sadd.s32 %s51, 1
    %s53 = scalar_select %p50, %s51, %s52
    %p56 = pneg %p50
    %p57 = scmp.eq.s32.totalorder %s15, 1
    %p58 = por %p56, %p57
    %p59 = scmp.ne.s32.totalorder %s51, %s54
    %p60 = scmp.eq.s32.totalorder %s15, 0
    %p61 = por %p59, %p60
    %p62 = scmp.ne.s32.totalorder %s51, %s54
    %p63 = scmp.eq.s32.totalorder %s20, 1
    %p64 = por %p62, %p63
    %p65 = scmp.ne.s32.totalorder %s54, %s55
    %p66 = scmp.eq.s32.totalorder %s20, 0
    %p67 = por %p65, %p66
    %p68 = scmp.ne.s32.totalorder %s54, %s55
    %p69 = scmp.eq.s32.totalorder %s21, 1
    %p70 = por %p68, %p69
    %p72 = scmp.ne.s32.totalorder %s55, %s71
    %p73 = scmp.eq.s32.totalorder %s21, 0
    %p74 = por %p72, %p73
    %s75 = ssub.s32 %s15, %s22
    %p76 = scmp.eq.s32.totalorder %s75, 0
    %s78 = sadd.s32 %s77, 1
    %s79 = scalar_select %p76, %s77, %s78
    %p82 = pneg %p76
    %p83 = scmp.eq.s32.totalorder %s15, 1
    %p84 = por %p82, %p83
    %p85 = scmp.ne.s32.totalorder %s77, %s80
    %p86 = scmp.eq.s32.totalorder %s15, 0
    %p87 = por %p85, %p86
    %p88 = scmp.ne.s32.totalorder %s77, %s80
    %p89 = scmp.eq.s32.totalorder %s20, 1
    %p90 = por %p88, %p89
    %p91 = scmp.ne.s32.totalorder %s80, %s81
    %p92 = scmp.eq.s32.totalorder %s20, 0
    %p93 = por %p91, %p92
    %p94 = scmp.ne.s32.totalorder %s80, %s81
    %p95 = scmp.eq.s32.totalorder %s21, 1
    %p96 = por %p94, %p95
    %p98 = scmp.ne.s32.totalorder %s81, %s97
    %p99 = scmp.eq.s32.totalorder %s21, 0
    %p100 = por %p98, %p99
    %s101 = ssub.s32 %s15, %s22
    %p102 = scmp.eq.s32.totalorder %s101, 0
    %s104 = sadd.s32 %s103, 1
    %s105 = scalar_select %p102, %s103, %s104
    %p108 = pneg %p102
    %p109 = scmp.eq.s32.totalorder %s15, 1
    %p110 = por %p108, %p109
    %p111 = scmp.ne.s32.totalorder %s103, %s106
    %p112 = scmp.eq.s32.totalorder %s15, 0
    %p113 = por %p111, %p112
    %p114 = scmp.ne.s32.totalorder %s103, %s106
    %p115 = scmp.eq.s32.totalorder %s20, 1
    %p116 = por %p114, %p115
    %p117 = scmp.ne.s32.totalorder %s106, %s107
    %p118 = scmp.eq.s32.totalorder %s20, 0
    %p119 = por %p117, %p118
    %p120 = scmp.ne.s32.totalorder %s106, %s107
    %p121 = scmp.eq.s32.totalorder %s21, 1
    %p122 = por %p120, %p121
    %p124 = scmp.ne.s32.totalorder %s107, %s123
    %p125 = scmp.eq.s32.totalorder %s21, 0
    %p126 = por %p124, %p125
    %s127 = ssub.s32 %s15, %s22
    %p128 = scmp.eq.s32.totalorder %s127, 0
    %s130 = sadd.s32 %s129, 1
    %s131 = scalar_select %p128, %s129, %s130
    %p134 = pneg %p128
    %p135 = scmp.eq.s32.totalorder %s15, 1
    %p136 = por %p134, %p135
    %p137 = scmp.ne.s32.totalorder %s129, %s132
    %p138 = scmp.eq.s32.totalorder %s15, 0
    %p139 = por %p137, %p138
    %p140 = scmp.ne.s32.totalorder %s129, %s132
    %p141 = scmp.eq.s32.totalorder %s20, 1
    %p142 = por %p140, %p141
    %p143 = scmp.ne.s32.totalorder %s132, %s133
    %p144 = scmp.eq.s32.totalorder %s20, 0
    %p145 = por %p143, %p144
    %p146 = scmp.ne.s32.totalorder %s132, %s133
    %p147 = scmp.eq.s32.totalorder %s21, 1
    %p148 = por %p146, %p147
    %p150 = scmp.ne.s32.totalorder %s133, %s149
    %p151 = scmp.eq.s32.totalorder %s21, 0
    %p152 = por %p150, %p151
    %s153 = ssub.s32 %s15, %s22
    %p154 = scmp.eq.s32.totalorder %s153, 0
    %s156 = sadd.s32 %s155, 1
    %s157 = scalar_select %p154, %s155, %s156
    %p160 = pneg %p154
    %p161 = scmp.eq.s32.totalorder %s15, 1
    %p162 = por %p160, %p161
    %p163 = scmp.ne.s32.totalorder %s155, %s158
    %p164 = scmp.eq.s32.totalorder %s15, 0
    %p165 = por %p163, %p164
    %p166 = scmp.ne.s32.totalorder %s155, %s158
    %p167 = scmp.eq.s32.totalorder %s20, 1
    %p168 = por %p166, %p167
    %p169 = scmp.ne.s32.totalorder %s158, %s159
    %p170 = scmp.eq.s32.totalorder %s20, 0
    %p171 = por %p169, %p170
    %p172 = scmp.ne.s32.totalorder %s158, %s159
    %p173 = scmp.eq.s32.totalorder %s21, 1
    %p174 = por %p172, %p173
    %p176 = scmp.ne.s32.totalorder %s159, %s175
    %p177 = scmp.eq.s32.totalorder %s21, 0
    %p178 = por %p176, %p177
    %s179 = ssub.s32 %s15, %s22
    %p180 = scmp.eq.s32.totalorder %s179, 0
    %s182 = sadd.s32 %s181, 1
    %s183 = scalar_select %p180, %s181, %s182
    %p186 = pneg %p180
    %p187 = scmp.eq.s32.totalorder %s15, 1
    %p188 = por %p186, %p187
    %p189 = scmp.ne.s32.totalorder %s181, %s184
    %p190 = scmp.eq.s32.totalorder %s15, 0
    %p191 = por %p189, %p190
    %p192 = scmp.ne.s32.totalorder %s181, %s184
    %p193 = scmp.eq.s32.totalorder %s20, 1
    %p194 = por %p192, %p193
    %p195 = scmp.ne.s32.totalorder %s184, %s185
    %p196 = scmp.eq.s32.totalorder %s20, 0
    %p197 = por %p195, %p196
    %p198 = scmp.ne.s32.totalorder %s184, %s185
    %p199 = scmp.eq.s32.totalorder %s21, 1
    %p200 = por %p198, %p199
    %p202 = scmp.ne.s32.totalorder %s185, %s201
    %p203 = scmp.eq.s32.totalorder %s21, 0
    %p204 = por %p202, %p203
    %s205 = ssub.s32 %s15, %s22
    %p206 = scmp.eq.s32.totalorder %s205, 0
    %s208 = sadd.s32 %s207, 1
    %s209 = scalar_select %p206, %s207, %s208
    %p212 = pneg %p206
    %p213 = scmp.eq.s32.totalorder %s15, 1
    %p214 = por %p212, %p213
    %p215 = scmp.ne.s32.totalorder %s207, %s210
    %p216 = scmp.eq.s32.totalorder %s15, 0
    %p217 = por %p215, %p216
    %p218 = scmp.ne.s32.totalorder %s207, %s210
    %p219 = scmp.eq.s32.totalorder %s20, 1
    %p220 = por %p218, %p219
    %p221 = scmp.ne.s32.totalorder %s210, %s211
    %p222 = scmp.eq.s32.totalorder %s20, 0
    %p223 = por %p221, %p222
    %p224 = scmp.ne.s32.totalorder %s210, %s211
    %p225 = scmp.eq.s32.totalorder %s21, 1
    %p226 = por %p224, %p225
    %p228 = scmp.ne.s32.totalorder %s211, %s227
    %p229 = scmp.eq.s32.totalorder %s21, 0
    %p230 = por %p228, %p229
    %s231 = ssub.s32 %s15, %s22
    %p232 = scmp.eq.s32.totalorder %s231, 0
    %s234 = sadd.s32 %s233, 1
    %s235 = scalar_select %p232, %s233, %s234
    %p238 = pneg %p232
    %p239 = scmp.eq.s32.totalorder %s15, 1
    %p240 = por %p238, %p239
    %p241 = scmp.ne.s32.totalorder %s233, %s236
    %p242 = scmp.eq.s32.totalorder %s15, 0
    %p243 = por %p241, %p242
    %p244 = scmp.ne.s32.totalorder %s233, %s236
    %p245 = scmp.eq.s32.totalorder %s20, 1
    %p246 = por %p244, %p245
    %p247 = scmp.ne.s32.totalorder %s236, %s237
    %p248 = scmp.eq.s32.totalorder %s20, 0
    %p249 = por %p247, %p248
    %p250 = scmp.ne.s32.totalorder %s236, %s237
    %p251 = scmp.eq.s32.totalorder %s21, 1
    %p252 = por %p250, %p251
    %p254 = scmp.ne.s32.totalorder %s237, %s253
    %p255 = scmp.eq.s32.totalorder %s21, 0
    %p256 = por %p254, %p255
    %s257 = ssub.s32 %s15, %s22
    %p258 = scmp.eq.s32.totalorder %s257, 0
    %s260 = sadd.s32 %s259, 1
    %s261 = scalar_select %p258, %s259, %s260
    %p264 = pneg %p258
    %p265 = scmp.eq.s32.totalorder %s15, 1
    %p266 = por %p264, %p265
    %p267 = scmp.ne.s32.totalorder %s259, %s262
    %p268 = scmp.eq.s32.totalorder %s15, 0
    %p269 = por %p267, %p268
    %p270 = scmp.ne.s32.totalorder %s259, %s262
    %p271 = scmp.eq.s32.totalorder %s20, 1
    %p272 = por %p270, %p271
    %p273 = scmp.ne.s32.totalorder %s262, %s263
    %p274 = scmp.eq.s32.totalorder %s20, 0
    %p275 = por %p273, %p274
    %p276 = scmp.ne.s32.totalorder %s262, %s263
    %p277 = scmp.eq.s32.totalorder %s21, 1
    %p278 = por %p276, %p277
    %p280 = scmp.ne.s32.totalorder %s263, %s279
    %p281 = scmp.eq.s32.totalorder %s21, 0
    %p282 = por %p280, %p281
    %p283 = scmp.le.s32.totalorder 1, %s15
    %p284 = scmp.lt.s32.totalorder %s15, 3
    %p285 = pnand %p283, %p284
    %p286 = pneg %p285
    // Predicated region
    $region9: #{forward.1} parent=5 // pred_check
      _
    $region10: #{forward.1} parent=5 // pred_check_branch
      %288 = sbr.rel (%p285) target = $region12
    $region11: #{forward.1} parent=5 // pred_region
      %s289 = ssub.s32 %s15, 1
    $region12: #{forward.1} parent=5 // pred_fallthru
      _
    %p290 = scmp.lt.s32.totalorder %s15, 2
    // Predicated region
    $region13: #{forward.1} parent=5 // pred_check
      %p291 = pneg %p290
    $region14: #{forward.1} parent=5 // pred_check_branch
      %293 = sbr.rel (%p291) target = $region16
    $region15: #{forward.1} parent=5 // pred_region
      // Predicated region
      $region17: #{forward.1} parent=15 // pred_check
        %p294 = pneg %p35
      $region18: #{forward.1} parent=15 // pred_check_branch
        %296 = sbr.rel (%p294) target = $region20
      $region19: #{forward.1} parent=15 // pred_region
        %p297 = scmp.lt.s32.totalorder %s15, 1
        %s298 = scalar_select %p297, %s15, 1
        %s299 = smul.addr %s298, 4
        %s300 = smul.addr %s299, 8
        %s301 = scalar_lea.vmem %s0, %s300
      $region20: #{forward.1} parent=15 // pred_fallthru
        _
      // Predicated region
      $region21: #{forward.1} parent=15 // pred_check
        %p302 = pneg %p61
      $region22: #{forward.1} parent=15 // pred_check_branch
        %304 = sbr.rel (%p302) target = $region24
      $region23: #{forward.1} parent=15 // pred_region
        %p305 = scmp.lt.s32.totalorder %s15, 1
        %s306 = scalar_select %p305, %s15, 1
        %s307 = smul.addr %s306, 4
        %s308 = smul.addr %s307, 8
        %s309 = scalar_lea.vmem %s1, %s308
      $region24: #{forward.1} parent=15 // pred_fallthru
        _
      // Predicated region
      $region25: #{forward.1} parent=15 // pred_check
        %p310 = pneg %p87
      $region26: #{forward.1} parent=15 // pred_check_branch
        %312 = sbr.rel (%p310) target = $region28
      $region27: #{forward.1} parent=15 // pred_region
        %p313 = scmp.lt.s32.totalorder %s15, 1
        %s314 = scalar_select %p313, %s15, 1
        %s315 = scalar_lea.vmem %s2, %s314
      $region28: #{forward.1} parent=15 // pred_fallthru
        _
      // Predicated region
      $region29: #{forward.1} parent=15 // pred_check
        %p316 = pneg %p113
      $region30: #{forward.1} parent=15 // pred_check_branch
        %318 = sbr.rel (%p316) target = $region32
      $region31: #{forward.1} parent=15 // pred_region
        %p319 = scmp.lt.s32.totalorder %s15, 1
        %s320 = scalar_select %p319, %s15, 1
        %s321 = smul.addr %s320, 48
        %s322 = smul.addr %s321, 4
        %s323 = scalar_lea.vmem %s3, %s322
      $region32: #{forward.1} parent=15 // pred_fallthru
        _
      // Predicated region
      $region33: #{forward.1} parent=15 // pred_check
        %p324 = pneg %p139
      $region34: #{forward.1} parent=15 // pred_check_branch
        %326 = sbr.rel (%p324) target = $region36
      $region35: #{forward.1} parent=15 // pred_region
        %p327 = scmp.lt.s32.totalorder %s15, 1
        %s328 = scalar_select %p327, %s15, 1
        %s329 = smul.addr %s328, 4
        %s330 = scalar_lea.vmem %s4, %s329
      $region36: #{forward.1} parent=15 // pred_fallthru
        _
      // Predicated region
      $region37: #{forward.1} parent=15 // pred_check
        %p331 = pneg %p165
      $region38: #{forward.1} parent=15 // pred_check_branch
        %333 = sbr.rel (%p331) target = $region40
      $region39: #{forward.1} parent=15 // pred_region
        %p334 = scmp.lt.s32.totalorder %s15, 1
        %s335 = scalar_select %p334, %s15, 1
        %s336 = smul.addr %s335, 256
        %s337 = smul.addr %s336, 4
        %s338 = scalar_lea.vmem %s5, %s337
      $region40: #{forward.1} parent=15 // pred_fallthru
        _
      // Predicated region
      $region41: #{forward.1} parent=15 // pred_check
        %p339 = pneg %p191
      $region42: #{forward.1} parent=15 // pred_check_branch
        %341 = sbr.rel (%p339) target = $region44
      $region43: #{forward.1} parent=15 // pred_region
        %p342 = scmp.lt.s32.totalorder %s15, 1
        %s343 = scalar_select %p342, %s15, 1
        %s344 = smul.addr %s343, 4
        %s345 = scalar_lea.vmem %s6, %s344
      $region44: #{forward.1} parent=15 // pred_fallthru
        _
      // Predicated region
      $region45: #{forward.1} parent=15 // pred_check
        %p346 = pneg %p217
      $region46: #{forward.1} parent=15 // pred_check_branch
        %348 = sbr.rel (%p346) target = $region48
      $region47: #{forward.1} parent=15 // pred_region
        %p349 = scmp.lt.s32.totalorder %s15, 1
        %s350 = scalar_select %p349, %s15, 1
        %s351 = smul.addr %s350, 64
        %s352 = smul.addr %s351, 4
        %s353 = scalar_lea.vmem %s7, %s352
      $region48: #{forward.1} parent=15 // pred_fallthru
        _
      // Predicated region
      $region49: #{forward.1} parent=15 // pred_check
        %p354 = pneg %p243
      $region50: #{forward.1} parent=15 // pred_check_branch
        %356 = sbr.rel (%p354) target = $region52
      $region51: #{forward.1} parent=15 // pred_region
        %p357 = scmp.lt.s32.totalorder %s15, 1
        %s358 = scalar_select %p357, %s15, 1
        %s359 = smul.addr %s358, 4
        %s360 = smul.addr %s359, 8
        %s361 = scalar_lea.vmem %s8, %s360
      $region52: #{forward.1} parent=15 // pred_fallthru
        _
    $region16: #{forward.1} parent=5 // pred_fallthru
      _
    %p362 = scmp.le.s32.totalorder 1, %s15
    %p363 = scmp.lt.s32.totalorder %s15, 3
    %p364 = pnand %p362, %p363
    %p365 = pneg %p364
    // Predicated region
    $region53: #{forward.1} parent=5 // pred_check
      _
    $region54: #{forward.1} parent=5 // pred_check_branch
      %367 = sbr.rel (%p364) target = $region56
    $region55: #{forward.1} parent=5 // pred_region
      %s368 = ssub.s32 %s15, 1
      %p369 = scmp.lt.s32.totalorder %s20, 1
      %s370 = scalar_select %p369, %s20, 1
      %s371 = smul.addr %s370, 4
      %s372 = smul.addr %s371, 8
      %s373 = scalar_lea.vmem %s0, %s372
      %p374 = pneg %p41
      %p375 = pneg %p38
      %p376 = scmp.lt.s32.totalorder %s20, 1
      %s377 = scalar_select %p376, %s20, 1
      %s378 = smul.addr %s377, 4
      %s379 = smul.addr %s378, 8
      %s380 = scalar_lea.vmem %s1, %s379
      %p381 = pneg %p67
      %p382 = pneg %p64
      %p383 = scmp.lt.s32.totalorder %s20, 1
      %s384 = scalar_select %p383, %s20, 1
      %s385 = scalar_lea.vmem %s2, %s384
      %p386 = pneg %p93
      %p387 = pneg %p90
      %p388 = scmp.lt.s32.totalorder %s20, 1
      %s389 = scalar_select %p388, %s20, 1
      %s390 = smul.addr %s389, 48
      %s391 = smul.addr %s390, 4
      %s392 = scalar_lea.vmem %s3, %s391
      %p393 = pneg %p119
      %p394 = pneg %p116
      %p395 = scmp.lt.s32.totalorder %s20, 1
      %s396 = scalar_select %p395, %s20, 1
      %s397 = smul.addr %s396, 4
      %s398 = scalar_lea.vmem %s4, %s397
      %p399 = pneg %p145
      %p400 = pneg %p142
      %p401 = scmp.lt.s32.totalorder %s20, 1
      %s402 = scalar_select %p401, %s20, 1
      %s403 = smul.addr %s402, 256
      %s404 = smul.addr %s403, 4
      %s405 = scalar_lea.vmem %s5, %s404
      %p406 = pneg %p171
      %p407 = pneg %p168
      %p408 = scmp.lt.s32.totalorder %s20, 1
      %s409 = scalar_select %p408, %s20, 1
      %s410 = smul.addr %s409, 4
      %s411 = scalar_lea.vmem %s6, %s410
      %p412 = pneg %p197
      %p413 = pneg %p194
      %p414 = scmp.lt.s32.totalorder %s20, 1
      %s415 = scalar_select %p414, %s20, 1
      %s416 = smul.addr %s415, 64
      %s417 = smul.addr %s416, 4
      %s418 = scalar_lea.vmem %s7, %s417
      %p419 = pneg %p223
      %p420 = pneg %p220
      %p421 = scmp.lt.s32.totalorder %s20, 1
      %s422 = scalar_select %p421, %s20, 1
      %s423 = smul.addr %s422, 4
      %s424 = smul.addr %s423, 8
      %s425 = scalar_lea.vmem %s8, %s424
      %p426 = pneg %p249
      %p427 = pneg %p246
      %p428 = pneg %p275
      %p429 = pneg %p272
      %p430 = scmp.lt.s32.totalorder %s20, 1
      %s431 = scalar_select %p430, %s20, 1
      %s432 = smul.addr %s431, 4
      %s433 = smul.addr %s432, 8
      %s434 = scalar_lea.vmem %s9, %s433
      %p435 = scmp.lt.s32.totalorder %s20, 1
      %s436 = scalar_select %p435, %s20, 1
      %s437 = smul.addr %s436, 4
      %s438 = smul.addr %s437, 8
      %s439 = scalar_lea.vmem %s0, %s438
      %p440 = scmp.lt.s32.totalorder %s20, 1
      %s441 = scalar_select %p440, %s20, 1
      %s442 = smul.addr %s441, 4
      %s443 = smul.addr %s442, 8
      %s444 = scalar_lea.vmem %s1, %s443
      %p445 = scmp.lt.s32.totalorder %s20, 1
      %s446 = scalar_select %p445, %s20, 1
      %s447 = scalar_lea.vmem %s2, %s446
      %p448 = scmp.lt.s32.totalorder %s20, 1
      %s449 = scalar_select %p448, %s20, 1
      %s450 = smul.addr %s449, 48
      %s451 = smul.addr %s450, 4
      %s452 = scalar_lea.vmem %s3, %s451
      %p453 = scmp.lt.s32.totalorder %s20, 1
      %s454 = scalar_select %p453, %s20, 1
      %s455 = smul.addr %s454, 4
      %s456 = scalar_lea.vmem %s4, %s455
      %p457 = scmp.lt.s32.totalorder %s20, 1
      %s458 = scalar_select %p457, %s20, 1
      %s459 = smul.addr %s458, 256
      %s460 = smul.addr %s459, 4
      %s461 = scalar_lea.vmem %s5, %s460
      %p462 = scmp.lt.s32.totalorder %s20, 1
      %s463 = scalar_select %p462, %s20, 1
      %s464 = smul.addr %s463, 4
      %s465 = scalar_lea.vmem %s6, %s464
      %p466 = scmp.lt.s32.totalorder %s20, 1
      %s467 = scalar_select %p466, %s20, 1
      %s468 = smul.addr %s467, 64
      %s469 = smul.addr %s468, 4
      %s470 = scalar_lea.vmem %s7, %s469
      %p471 = scmp.lt.s32.totalorder %s20, 1
      %s472 = scalar_select %p471, %s20, 1
      %s473 = smul.addr %s472, 4
      %s474 = smul.addr %s473, 8
      %s475 = scalar_lea.vmem %s8, %s474
      %p476 = scmp.lt.s32.totalorder %s20, 1
      %s477 = scalar_select %p476, %s20, 1
      %s478 = smul.addr %s477, 4
      %s479 = smul.addr %s478, 8
      %s480 = scalar_lea.vmem %s9, %s479
      %v482 = vld [vmem:[%s447] sm:$0x1]
      %v483 = vld [vmem:[%s444] sm:$0xff]
      %v484 = vld [vmem:[%s444 + $0x8] sm:$0xff]
      %v485 = vld [vmem:[%s444 + $0x10] sm:$0xff]
      %v486 = vld [vmem:[%s444 + $0x18] sm:$0xff]
      %v487 = vld [vmem:[%s439] sm:$0xff]
      %v488 = vld [vmem:[%s439 + $0x8] sm:$0xff]
      %v489 = vld [vmem:[%s439 + $0x10] sm:$0xff]
      %v490 = vld [vmem:[%s439 + $0x18] sm:$0xff]
      %v492 = vlaneseq
      %v493 = vshrl.u32 %v492, 7
      %v494 = vsub.s32 0, %v493
      %v495 = vrot.slane %v482, %v494
      %v497 = vsub.f32 %v487, %v495
      %v498 = vsub.f32 %v488, %v495
      %v499 = vsub.f32 %v489, %v495
      %v500 = vsub.f32 %v490, %v495
      %502 = vset.pattern.permute.xlu0 0
      %503 = vperm.xlu0 %502, %v483
      %v504 = vpop.permute.xlu0 %503
      %507 = vset.pattern.permute.xlu0 0
      %508 = vperm.xlu0 %507, %v484
      %v509 = vpop.permute.xlu0 %508
      %512 = vset.pattern.permute.xlu0 0
      %513 = vperm.xlu0 %512, %v485
      %v514 = vpop.permute.xlu0 %513
      %517 = vset.pattern.permute.xlu0 0
      %518 = vperm.xlu0 %517, %v486
      %v519 = vpop.permute.xlu0 %518
      %v521 = vmul.f32 %v504, %v497
      %v522 = vmul.f32 %v509, %v498
      %v523 = vmul.f32 %v514, %v499
      %v524 = vmul.f32 %v519, %v500
      %v525 = vadd.f32 %v495, %v521
      %v526 = vadd.f32 %v495, %v522
      %v527 = vadd.f32 %v495, %v523
      %v528 = vadd.f32 %v495, %v524
      %v529 = vpack.c.bf16 %v526, %v525
      %v530 = vpack.c.bf16 %v528, %v527
      %v531 = vld [vmem:[%s452] sm:$0xff]
      %v532 = vld [vmem:[%s452 + $0x8] sm:$0xff]
      %v533 = vld [vmem:[%s452 + $0x10] sm:$0xff]
      %v534 = vld [vmem:[%s452 + $0x18] sm:$0xff]
      %v535 = vld [vmem:[%s452 + $0x20] sm:$0xff]
      %v536 = vld [vmem:[%s452 + $0x28] sm:$0xff]
      %v537 = vld [vmem:[%s452 + $0x30] sm:$0xff]
      %v538 = vld [vmem:[%s452 + $0x38] sm:$0xff]
      %v539 = vld [vmem:[%s452 + $0x40] sm:$0xff]
      %v540 = vld [vmem:[%s452 + $0x48] sm:$0xff]
      %v541 = vld [vmem:[%s452 + $0x50] sm:$0xff]
      %v542 = vld [vmem:[%s452 + $0x58] sm:$0xff]
      %v543 = vld [vmem:[%s452 + $0x60] sm:$0xff]
      %v544 = vld [vmem:[%s452 + $0x68] sm:$0xff]
      %v545 = vld [vmem:[%s452 + $0x70] sm:$0xff]
      %v546 = vld [vmem:[%s452 + $0x78] sm:$0xff]
      %v547 = vld [vmem:[%s452 + $0x80] sm:$0xff]
      %v548 = vld [vmem:[%s452 + $0x88] sm:$0xff]
      %v549 = vld [vmem:[%s452 + $0x90] sm:$0xff]
      %v550 = vld [vmem:[%s452 + $0x98] sm:$0xff]
      %v551 = vld [vmem:[%s452 + $0xa0] sm:$0xff]
      %v552 = vld [vmem:[%s452 + $0xa8] sm:$0xff]
      %v553 = vld [vmem:[%s452 + $0xb0] sm:$0xff]
      %v554 = vld [vmem:[%s452 + $0xb8] sm:$0xff]
      %v555 = vld [vmem:[%s456] sm:$0xf]
      %v557 = vlaneseq
      %v558 = vshrl.u32 %v557, 7
      %v559 = vsub.s32 0, %v558
      %v560 = vrot.slane %v555, %v559
      %v561 = vlaneseq
      %v562 = vshrl.u32 %v561, 7
      %v563 = vsub.s32 1, %v562
      %v564 = vrot.slane %v555, %v563
      %v565 = vlaneseq
      %v566 = vshrl.u32 %v565, 7
      %v567 = vsub.s32 2, %v566
      %v568 = vrot.slane %v555, %v567
      %v569 = vlaneseq
      %v570 = vshrl.u32 %v569, 7
      %v571 = vsub.s32 3, %v570
      %v572 = vrot.slane %v555, %v571
      %v601 = vunpack.c.l.b16 %v531
      %v602 = vunpack.c.h.b16 %v531
      %v603 = vunpack.c.l.b16 %v532
      %v604 = vunpack.c.h.b16 %v532
      %v605 = vunpack.c.l.b16 %v533
      %v606 = vunpack.c.h.b16 %v533
      %v607 = vunpack.c.l.b16 %v534
      %v608 = vunpack.c.h.b16 %v534
      %v609 = vunpack.c.l.b16 %v535
      %v610 = vunpack.c.h.b16 %v535
      %v611 = vunpack.c.l.b16 %v536
      %v612 = vunpack.c.h.b16 %v536
      %v613 = vunpack.c.l.b16 %v537
      %v614 = vunpack.c.h.b16 %v537
      %v615 = vunpack.c.l.b16 %v538
      %v616 = vunpack.c.h.b16 %v538
      %v617 = vunpack.c.l.b16 %v539
      %v618 = vunpack.c.h.b16 %v539
      %v619 = vunpack.c.l.b16 %v540
      %v620 = vunpack.c.h.b16 %v540
      %v621 = vunpack.c.l.b16 %v541
      %v622 = vunpack.c.h.b16 %v541
      %v623 = vunpack.c.l.b16 %v542
      %v624 = vunpack.c.h.b16 %v542
      %v625 = vunpack.c.l.b16 %v543
      %v626 = vunpack.c.h.b16 %v543
      %v627 = vunpack.c.l.b16 %v544
      %v628 = vunpack.c.h.b16 %v544
      %v629 = vunpack.c.l.b16 %v545
      %v630 = vunpack.c.h.b16 %v545
      %v631 = vunpack.c.l.b16 %v546
      %v632 = vunpack.c.h.b16 %v546
      %v633 = vunpack.c.l.b16 %v547
      %v634 = vunpack.c.h.b16 %v547
      %v635 = vunpack.c.l.b16 %v548
      %v636 = vunpack.c.h.b16 %v548
      %v637 = vunpack.c.l.b16 %v549
      %v638 = vunpack.c.h.b16 %v549
      %v639 = vunpack.c.l.b16 %v550
      %v640 = vunpack.c.h.b16 %v550
      %v641 = vunpack.c.l.b16 %v551
      %v642 = vunpack.c.h.b16 %v551
      %v643 = vunpack.c.l.b16 %v552
      %v644 = vunpack.c.h.b16 %v552
      %v645 = vunpack.c.l.b16 %v553
      %v646 = vunpack.c.h.b16 %v553
      %v647 = vunpack.c.l.b16 %v554
      %v648 = vunpack.c.h.b16 %v554
      %v649 = vpack.c.b16 %v605, %v601
      %v650 = vpack.c.b16 %v606, %v602
      %v651 = vpack.c.b16 %v607, %v603
      %v652 = vpack.c.b16 %v608, %v604
      %v653 = vpack.c.b16 %v613, %v609
      %v654 = vpack.c.b16 %v614, %v610
      %v655 = vpack.c.b16 %v615, %v611
      %v656 = vpack.c.b16 %v616, %v612
      %v657 = vpack.c.b16 %v621, %v617
      %v658 = vpack.c.b16 %v622, %v618
      %v659 = vpack.c.b16 %v623, %v619
      %v660 = vpack.c.b16 %v624, %v620
      %v661 = vpack.c.b16 %v629, %v625
      %v662 = vpack.c.b16 %v630, %v626
      %v663 = vpack.c.b16 %v631, %v627
      %v664 = vpack.c.b16 %v632, %v628
      %v665 = vpack.c.b16 %v637, %v633
      %v666 = vpack.c.b16 %v638, %v634
      %v667 = vpack.c.b16 %v639, %v635
      %v668 = vpack.c.b16 %v640, %v636
      %v669 = vpack.c.b16 %v645, %v641
      %v670 = vpack.c.b16 %v646, %v642
      %v671 = vpack.c.b16 %v647, %v643
      %v672 = vpack.c.b16 %v648, %v644
      %vm697 = vcmask 785408
      %v699 = vsel %vm697, %v529, 0
      %v702 = vsel %vm697, %v530, 0
      %704 = vmatprep.subr.bf16.mxu0 0
      %705 = vmatpush1.bf16.msra.mxu0 0
      %706 = vmatprep.subr.bf16.mxu0 0
      %707 = vmatpush1.bf16.msra.mxu0 0
      %708 = vmatprep.subr.bf16.mxu0 %v670
      %709 = vmatpush1.bf16.msra.mxu0 %v669
      %710 = vmatprep.subr.bf16.mxu0 %v666
      %711 = vmatpush1.bf16.msra.mxu0 %v665
      %712 = vmatprep.subr.bf16.mxu0 %v662
      %713 = vmatpush1.bf16.msra.mxu0 %v661
      %714 = vmatprep.subr.bf16.mxu0 %v658
      %715 = vmatpush1.bf16.msra.mxu0 %v657
      %716 = vmatprep.subr.bf16.mxu0 %v654
      %717 = vmatpush1.bf16.msra.mxu0 %v653
      %718 = vmatprep.subr.bf16.mxu0 %v650
      %719 = vmatpush1.bf16.msra.mxu0 %v649
      %720 = vmatprep.subr.bf16.mxu0 0
      %721 = vmatpush2.bf16.msra.mxu0 0
      %722 = vmatprep.subr.bf16.mxu0 0
      %723 = vmatpush2.bf16.msra.mxu0 0
      %724 = vmatprep.subr.bf16.mxu0 0
      %725 = vmatpush2.bf16.msra.mxu0 0
      %726 = vmatprep.subr.bf16.mxu0 0
      %727 = vmatpush2.bf16.msra.mxu0 0
      %728 = vmatprep.subr.bf16.mxu0 0
      %729 = vmatpush2.bf16.msra.mxu0 0
      %730 = vmatprep.subr.bf16.mxu0 0
      %731 = vmatpush2.bf16.msra.mxu0 0
      %732 = vmatprep.subr.bf16.mxu0 0
      %733 = vmatpush2.bf16.msra.mxu0 0
      %734 = vmatprep.subr.bf16.mxu0 0
      %735 = vmatpush2.bf16.msra.mxu0 0
      %736 = vmatprep.mubr.bf16.mxu0 0
      %737 = vmatmul.mubr.bf16.gmra.mxu0 %v699
      %v738 = vpop.f32.mrf.mxu0
      %v739 = vadd.f32 %v560, %v738
      %v740 = vpop.f32.mrf.mxu0
      %v741 = vadd.f32 %v564, %v740
      %v742 = vpop.f32.mrf.mxu0
      %v743 = vadd.f32 %v560, %v742
      %v744 = vpop.f32.mrf.mxu0
      %v745 = vadd.f32 %v564, %v744
      %746 = vmatprep.mubr.bf16.mxu0 0
      %747 = vmatmul.mubr.bf16.gmra.mxu0 %v702
      %v748 = vpop.f32.mrf.mxu0
      %v749 = vadd.f32 %v560, %v748
      %v750 = vpop.f32.mrf.mxu0
      %v751 = vadd.f32 %v564, %v750
      %v752 = vpop.f32.mrf.mxu0
      %v753 = vadd.f32 %v560, %v752
      %v754 = vpop.f32.mrf.mxu0
      %v755 = vadd.f32 %v564, %v754
      %756 = vdwg.mxu0
      %757 = vmatprep.subr.bf16.mxu0 0
      %758 = vmatpush1.bf16.msra.mxu0 0
      %759 = vmatprep.subr.bf16.mxu0 0
      %760 = vmatpush1.bf16.msra.mxu0 0
      %761 = vmatprep.subr.bf16.mxu0 %v672
      %762 = vmatpush1.bf16.msra.mxu0 %v671
      %763 = vmatprep.subr.bf16.mxu0 %v668
      %764 = vmatpush1.bf16.msra.mxu0 %v667
      %765 = vmatprep.subr.bf16.mxu0 %v664
      %766 = vmatpush1.bf16.msra.mxu0 %v663
      %767 = vmatprep.subr.bf16.mxu0 %v660
      %768 = vmatpush1.bf16.msra.mxu0 %v659
      %769 = vmatprep.subr.bf16.mxu0 %v656
      %770 = vmatpush1.bf16.msra.mxu0 %v655
      %771 = vmatprep.subr.bf16.mxu0 %v652
      %772 = vmatpush1.bf16.msra.mxu0 %v651
      %773 = vmatprep.subr.bf16.mxu0 0
      %774 = vmatpush2.bf16.msra.mxu0 0
      %775 = vmatprep.subr.bf16.mxu0 0
      %776 = vmatpush2.bf16.msra.mxu0 0
      %777 = vmatprep.subr.bf16.mxu0 0
      %778 = vmatpush2.bf16.msra.mxu0 0
      %779 = vmatprep.subr.bf16.mxu0 0
      %780 = vmatpush2.bf16.msra.mxu0 0
      %781 = vmatprep.subr.bf16.mxu0 0
      %782 = vmatpush2.bf16.msra.mxu0 0
      %783 = vmatprep.subr.bf16.mxu0 0
      %784 = vmatpush2.bf16.msra.mxu0 0
      %785 = vmatprep.subr.bf16.mxu0 0
      %786 = vmatpush2.bf16.msra.mxu0 0
      %787 = vmatprep.subr.bf16.mxu0 0
      %788 = vmatpush2.bf16.msra.mxu0 0
      %789 = vmatprep.mubr.bf16.mxu0 0
      %790 = vmatmul.mubr.bf16.gmra.mxu0 %v699
      %v791 = vpop.f32.mrf.mxu0
      %v792 = vadd.f32 %v568, %v791
      %v793 = vpop.f32.mrf.mxu0
      %v794 = vadd.f32 %v572, %v793
      %v795 = vpop.f32.mrf.mxu0
      %v796 = vadd.f32 %v568, %v795
      %v797 = vpop.f32.mrf.mxu0
      %v798 = vadd.f32 %v572, %v797
      %799 = vmatprep.mubr.bf16.mxu0 0
      %800 = vmatmul.mubr.bf16.gmra.mxu0 %v702
      %v801 = vpop.f32.mrf.mxu0
      %v802 = vadd.f32 %v568, %v801
      %v803 = vpop.f32.mrf.mxu0
      %v804 = vadd.f32 %v572, %v803
      %v805 = vpop.f32.mrf.mxu0
      %v806 = vadd.f32 %v568, %v805
      %v807 = vpop.f32.mrf.mxu0
      %v808 = vadd.f32 %v572, %v807
      %809 = vdwg.mxu0
      %v810 = vxor.u32 %v739, 2147483648
      %v811 = vxor.u32 %v741, 2147483648
      %v812 = vxor.u32 %v792, 2147483648
      %v813 = vxor.u32 %v794, 2147483648
      %v814 = vxor.u32 %v743, 2147483648
      %v815 = vxor.u32 %v745, 2147483648
      %v816 = vxor.u32 %v796, 2147483648
      %v817 = vxor.u32 %v798, 2147483648
      %v818 = vxor.u32 %v749, 2147483648
      %v819 = vxor.u32 %v751, 2147483648
      %v820 = vxor.u32 %v802, 2147483648
      %v821 = vxor.u32 %v804, 2147483648
      %v822 = vxor.u32 %v753, 2147483648
      %v823 = vxor.u32 %v755, 2147483648
      %v824 = vxor.u32 %v806, 2147483648
      %v825 = vxor.u32 %v808, 2147483648
      %v826 = vmul.f32 %v810, 1.442695
      %v827 = vpow.pop %v826
      %v828 = vmul.f32 %v811, 1.442695
      %v829 = vpow.pop %v828
      %v830 = vmul.f32 %v812, 1.442695
      %v831 = vpow.pop %v830
      %v832 = vmul.f32 %v813, 1.442695
      %v833 = vpow.pop %v832
      %v834 = vmul.f32 %v814, 1.442695
      %v835 = vpow.pop %v834
      %v836 = vmul.f32 %v815, 1.442695
      %v837 = vpow.pop %v836
      %v838 = vmul.f32 %v816, 1.442695
      %v839 = vpow.pop %v838
      %v840 = vmul.f32 %v817, 1.442695
      %v841 = vpow.pop %v840
      %v842 = vmul.f32 %v818, 1.442695
      %v843 = vpow.pop %v842
      %v844 = vmul.f32 %v819, 1.442695
      %v845 = vpow.pop %v844
      %v846 = vmul.f32 %v820, 1.442695
      %v847 = vpow.pop %v846
      %v848 = vmul.f32 %v821, 1.442695
      %v849 = vpow.pop %v848
      %v850 = vmul.f32 %v822, 1.442695
      %v851 = vpow.pop %v850
      %v852 = vmul.f32 %v823, 1.442695
      %v853 = vpow.pop %v852
      %v854 = vmul.f32 %v824, 1.442695
      %v855 = vpow.pop %v854
      %v856 = vmul.f32 %v825, 1.442695
      %v857 = vpow.pop %v856
      %v858 = vadd.f32 %v827, 1.0
      %v859 = vadd.f32 %v829, 1.0
      %v860 = vadd.f32 %v831, 1.0
      %v861 = vadd.f32 %v833, 1.0
      %v862 = vadd.f32 %v835, 1.0
      %v863 = vadd.f32 %v837, 1.0
      %v864 = vadd.f32 %v839, 1.0
      %v865 = vadd.f32 %v841, 1.0
      %v866 = vadd.f32 %v843, 1.0
      %v867 = vadd.f32 %v845, 1.0
      %v868 = vadd.f32 %v847, 1.0
      %v869 = vadd.f32 %v849, 1.0
      %v870 = vadd.f32 %v851, 1.0
      %v871 = vadd.f32 %v853, 1.0
      %v872 = vadd.f32 %v855, 1.0
      %v873 = vadd.f32 %v857, 1.0
      %v874 = vrcp.pop %v858
      %v875 = vmul.f32 1.0, %v874
      %v876 = vrcp.pop %v859
      %v877 = vmul.f32 1.0, %v876
      %v878 = vrcp.pop %v860
      %v879 = vmul.f32 1.0, %v878
      %v880 = vrcp.pop %v861
      %v881 = vmul.f32 1.0, %v880
      %v882 = vrcp.pop %v862
      %v883 = vmul.f32 1.0, %v882
      %v884 = vrcp.pop %v863
      %v885 = vmul.f32 1.0, %v884
      %v886 = vrcp.pop %v864
      %v887 = vmul.f32 1.0, %v886
      %v888 = vrcp.pop %v865
      %v889 = vmul.f32 1.0, %v888
      %v890 = vrcp.pop %v866
      %v891 = vmul.f32 1.0, %v890
      %v892 = vrcp.pop %v867
      %v893 = vmul.f32 1.0, %v892
      %v894 = vrcp.pop %v868
      %v895 = vmul.f32 1.0, %v894
      %v896 = vrcp.pop %v869
      %v897 = vmul.f32 1.0, %v896
      %v898 = vrcp.pop %v870
      %v899 = vmul.f32 1.0, %v898
      %v900 = vrcp.pop %v871
      %v901 = vmul.f32 1.0, %v900
      %v902 = vrcp.pop %v872
      %v903 = vmul.f32 1.0, %v902
      %v904 = vrcp.pop %v873
      %v905 = vmul.f32 1.0, %v904
      %v906 = vmul.f32 %v739, %v875
      %v907 = vmul.f32 %v741, %v877
      %v908 = vmul.f32 %v792, %v879
      %v909 = vmul.f32 %v794, %v881
      %v910 = vmul.f32 %v743, %v883
      %v911 = vmul.f32 %v745, %v885
      %v912 = vmul.f32 %v796, %v887
      %v913 = vmul.f32 %v798, %v889
      %v914 = vmul.f32 %v749, %v891
      %v915 = vmul.f32 %v751, %v893
      %v916 = vmul.f32 %v802, %v895
      %v917 = vmul.f32 %v804, %v897
      %v918 = vmul.f32 %v753, %v899
      %v919 = vmul.f32 %v755, %v901
      %v920 = vmul.f32 %v806, %v903
      %v921 = vmul.f32 %v808, %v905
      %v922 = vpack.c.bf16 %v910, %v906
      %v923 = vpack.c.bf16 %v911, %v907
      %v924 = vpack.c.bf16 %v912, %v908
      %v925 = vpack.c.bf16 %v913, %v909
      %v926 = vpack.c.bf16 %v918, %v914
      %v927 = vpack.c.bf16 %v919, %v915
      %v928 = vpack.c.bf16 %v920, %v916
      %v929 = vpack.c.bf16 %v921, %v917
      %v930 = vld [vmem:[%s461] sm:$0xff]
      %v931 = vld [vmem:[%s461 + $0x8] sm:$0xff]
      %v932 = vld [vmem:[%s461 + $0x10] sm:$0xff]
      %v933 = vld [vmem:[%s461 + $0x18] sm:$0xff]
      %v934 = vld [vmem:[%s461 + $0x20] sm:$0xff]
      %v935 = vld [vmem:[%s461 + $0x28] sm:$0xff]
      %v936 = vld [vmem:[%s461 + $0x30] sm:$0xff]
      %v937 = vld [vmem:[%s461 + $0x38] sm:$0xff]
      %v938 = vld [vmem:[%s461 + $0x40] sm:$0xff]
      %v939 = vld [vmem:[%s461 + $0x48] sm:$0xff]
      %v940 = vld [vmem:[%s461 + $0x50] sm:$0xff]
      %v941 = vld [vmem:[%s461 + $0x58] sm:$0xff]
      %v942 = vld [vmem:[%s461 + $0x60] sm:$0xff]
      %v943 = vld [vmem:[%s461 + $0x68] sm:$0xff]
      %v944 = vld [vmem:[%s461 + $0x70] sm:$0xff]
      %v945 = vld [vmem:[%s461 + $0x78] sm:$0xff]
      %v946 = vld [vmem:[%s461 + $0x80] sm:$0xff]
      %v947 = vld [vmem:[%s461 + $0x88] sm:$0xff]
      %v948 = vld [vmem:[%s461 + $0x90] sm:$0xff]
      %v949 = vld [vmem:[%s461 + $0x98] sm:$0xff]
      %v950 = vld [vmem:[%s461 + $0xa0] sm:$0xff]
      %v951 = vld [vmem:[%s461 + $0xa8] sm:$0xff]
      %v952 = vld [vmem:[%s461 + $0xb0] sm:$0xff]
      %v953 = vld [vmem:[%s461 + $0xb8] sm:$0xff]
      %v954 = vld [vmem:[%s461 + $0xc0] sm:$0xff]
      %v955 = vld [vmem:[%s461 + $0xc8] sm:$0xff]
      %v956 = vld [vmem:[%s461 + $0xd0] sm:$0xff]
      %v957 = vld [vmem:[%s461 + $0xd8] sm:$0xff]
      %v958 = vld [vmem:[%s461 + $0xe0] sm:$0xff]
      %v959 = vld [vmem:[%s461 + $0xe8] sm:$0xff]
      %v960 = vld [vmem:[%s461 + $0xf0] sm:$0xff]
      %v961 = vld [vmem:[%s461 + $0xf8] sm:$0xff]
      %v962 = vld [vmem:[%s461 + $0x100] sm:$0xff]
      %v963 = vld [vmem:[%s461 + $0x108] sm:$0xff]
      %v964 = vld [vmem:[%s461 + $0x110] sm:$0xff]
      %v965 = vld [vmem:[%s461 + $0x118] sm:$0xff]
      %v966 = vld [vmem:[%s461 + $0x120] sm:$0xff]
      %v967 = vld [vmem:[%s461 + $0x128] sm:$0xff]
      %v968 = vld [vmem:[%s461 + $0x130] sm:$0xff]
      %v969 = vld [vmem:[%s461 + $0x138] sm:$0xff]
      %v970 = vld [vmem:[%s461 + $0x140] sm:$0xff]
      %v971 = vld [vmem:[%s461 + $0x148] sm:$0xff]
      %v972 = vld [vmem:[%s461 + $0x150] sm:$0xff]
      %v973 = vld [vmem:[%s461 + $0x158] sm:$0xff]
      %v974 = vld [vmem:[%s461 + $0x160] sm:$0xff]
      %v975 = vld [vmem:[%s461 + $0x168] sm:$0xff]
      %v976 = vld [vmem:[%s461 + $0x170] sm:$0xff]
      %v977 = vld [vmem:[%s461 + $0x178] sm:$0xff]
      %v978 = vld [vmem:[%s461 + $0x180] sm:$0xff]
      %v979 = vld [vmem:[%s461 + $0x188] sm:$0xff]
      %v980 = vld [vmem:[%s461 + $0x190] sm:$0xff]
      %v981 = vld [vmem:[%s461 + $0x198] sm:$0xff]
      %v982 = vld [vmem:[%s461 + $0x1a0] sm:$0xff]
      %v983 = vld [vmem:[%s461 + $0x1a8] sm:$0xff]
      %v984 = vld [vmem:[%s461 + $0x1b0] sm:$0xff]
      %v985 = vld [vmem:[%s461 + $0x1b8] sm:$0xff]
      %v986 = vld [vmem:[%s461 + $0x1c0] sm:$0xff]
      %v987 = vld [vmem:[%s461 + $0x1c8] sm:$0xff]
      %v988 = vld [vmem:[%s461 + $0x1d0] sm:$0xff]
      %v989 = vld [vmem:[%s461 + $0x1d8] sm:$0xff]
      %v990 = vld [vmem:[%s461 + $0x1e0] sm:$0xff]
      %v991 = vld [vmem:[%s461 + $0x1e8] sm:$0xff]
      %v992 = vld [vmem:[%s461 + $0x1f0] sm:$0xff]
      %v993 = vld [vmem:[%s461 + $0x1f8] sm:$0xff]
      %v994 = vld [vmem:[%s461 + $0x200] sm:$0xff]
      %v995 = vld [vmem:[%s461 + $0x208] sm:$0xff]
      %v996 = vld [vmem:[%s461 + $0x210] sm:$0xff]
      %v997 = vld [vmem:[%s461 + $0x218] sm:$0xff]
      %v998 = vld [vmem:[%s461 + $0x220] sm:$0xff]
      %v999 = vld [vmem:[%s461 + $0x228] sm:$0xff]
      %v1000 = vld [vmem:[%s461 + $0x230] sm:$0xff]
      %v1001 = vld [vmem:[%s461 + $0x238] sm:$0xff]
      %v1002 = vld [vmem:[%s461 + $0x240] sm:$0xff]
      %v1003 = vld [vmem:[%s461 + $0x248] sm:$0xff]
      %v1004 = vld [vmem:[%s461 + $0x250] sm:$0xff]
      %v1005 = vld [vmem:[%s461 + $0x258] sm:$0xff]
      %v1006 = vld [vmem:[%s461 + $0x260] sm:$0xff]
      %v1007 = vld [vmem:[%s461 + $0x268] sm:$0xff]
      %v1008 = vld [vmem:[%s461 + $0x270] sm:$0xff]
      %v1009 = vld [vmem:[%s461 + $0x278] sm:$0xff]
      %v1010 = vld [vmem:[%s461 + $0x280] sm:$0xff]
      %v1011 = vld [vmem:[%s461 + $0x288] sm:$0xff]
      %v1012 = vld [vmem:[%s461 + $0x290] sm:$0xff]
      %v1013 = vld [vmem:[%s461 + $0x298] sm:$0xff]
      %v1014 = vld [vmem:[%s461 + $0x2a0] sm:$0xff]
      %v1015 = vld [vmem:[%s461 + $0x2a8] sm:$0xff]
      %v1016 = vld [vmem:[%s461 + $0x2b0] sm:$0xff]
      %v1017 = vld [vmem:[%s461 + $0x2b8] sm:$0xff]
      %v1018 = vld [vmem:[%s461 + $0x2c0] sm:$0xff]
      %v1019 = vld [vmem:[%s461 + $0x2c8] sm:$0xff]
      %v1020 = vld [vmem:[%s461 + $0x2d0] sm:$0xff]
      %v1021 = vld [vmem:[%s461 + $0x2d8] sm:$0xff]
      %v1022 = vld [vmem:[%s461 + $0x2e0] sm:$0xff]
      %v1023 = vld [vmem:[%s461 + $0x2e8] sm:$0xff]
      %v1024 = vld [vmem:[%s461 + $0x2f0] sm:$0xff]
      %v1025 = vld [vmem:[%s461 + $0x2f8] sm:$0xff]
      %v1026 = vld [vmem:[%s461 + $0x300] sm:$0xff]
      %v1027 = vld [vmem:[%s461 + $0x308] sm:$0xff]
      %v1028 = vld [vmem:[%s461 + $0x310] sm:$0xff]
      %v1029 = vld [vmem:[%s461 + $0x318] sm:$0xff]
      %v1030 = vld [vmem:[%s461 + $0x320] sm:$0xff]
      %v1031 = vld [vmem:[%s461 + $0x328] sm:$0xff]
      %v1032 = vld [vmem:[%s461 + $0x330] sm:$0xff]
      %v1033 = vld [vmem:[%s461 + $0x338] sm:$0xff]
      %v1034 = vld [vmem:[%s461 + $0x340] sm:$0xff]
      %v1035 = vld [vmem:[%s461 + $0x348] sm:$0xff]
      %v1036 = vld [vmem:[%s461 + $0x350] sm:$0xff]
      %v1037 = vld [vmem:[%s461 + $0x358] sm:$0xff]
      %v1038 = vld [vmem:[%s461 + $0x360] sm:$0xff]
      %v1039 = vld [vmem:[%s461 + $0x368] sm:$0xff]
      %v1040 = vld [vmem:[%s461 + $0x370] sm:$0xff]
      %v1041 = vld [vmem:[%s461 + $0x378] sm:$0xff]
      %v1042 = vld [vmem:[%s461 + $0x380] sm:$0xff]
      %v1043 = vld [vmem:[%s461 + $0x388] sm:$0xff]
      %v1044 = vld [vmem:[%s461 + $0x390] sm:$0xff]
      %v1045 = vld [vmem:[%s461 + $0x398] sm:$0xff]
      %v1046 = vld [vmem:[%s461 + $0x3a0] sm:$0xff]
      %v1047 = vld [vmem:[%s461 + $0x3a8] sm:$0xff]
      %v1048 = vld [vmem:[%s461 + $0x3b0] sm:$0xff]
      %v1049 = vld [vmem:[%s461 + $0x3b8] sm:$0xff]
      %v1050 = vld [vmem:[%s461 + $0x3c0] sm:$0xff]
      %v1051 = vld [vmem:[%s461 + $0x3c8] sm:$0xff]
      %v1052 = vld [vmem:[%s461 + $0x3d0] sm:$0xff]
      %v1053 = vld [vmem:[%s461 + $0x3d8] sm:$0xff]
      %v1054 = vld [vmem:[%s461 + $0x3e0] sm:$0xff]
      %v1055 = vld [vmem:[%s461 + $0x3e8] sm:$0xff]
      %v1056 = vld [vmem:[%s461 + $0x3f0] sm:$0xff]
      %v1057 = vld [vmem:[%s461 + $0x3f8] sm:$0xff]
      %v1058 = vld [vmem:[%s465] sm:$0xf]
      %v1060 = vlaneseq
      %v1061 = vshrl.u32 %v1060, 7
      %v1062 = vsub.s32 0, %v1061
      %v1063 = vrot.slane %v1058, %v1062
      %v1064 = vlaneseq
      %v1065 = vshrl.u32 %v1064, 7
      %v1066 = vsub.s32 1, %v1065
      %v1067 = vrot.slane %v1058, %v1066
      %v1068 = vlaneseq
      %v1069 = vshrl.u32 %v1068, 7
      %v1070 = vsub.s32 2, %v1069
      %v1071 = vrot.slane %v1058, %v1070
      %v1072 = vlaneseq
      %v1073 = vshrl.u32 %v1072, 7
      %v1074 = vsub.s32 3, %v1073
      %v1075 = vrot.slane %v1058, %v1074
      %v1208 = vunpack.c.l.b16 %v930
      %v1209 = vunpack.c.h.b16 %v930
      %v1210 = vunpack.c.l.b16 %v931
      %v1211 = vunpack.c.h.b16 %v931
      %v1212 = vunpack.c.l.b16 %v932
      %v1213 = vunpack.c.h.b16 %v932
      %v1214 = vunpack.c.l.b16 %v933
      %v1215 = vunpack.c.h.b16 %v933
      %v1216 = vunpack.c.l.b16 %v934
      %v1217 = vunpack.c.h.b16 %v934
      %v1218 = vunpack.c.l.b16 %v935
      %v1219 = vunpack.c.h.b16 %v935
      %v1220 = vunpack.c.l.b16 %v936
      %v1221 = vunpack.c.h.b16 %v936
      %v1222 = vunpack.c.l.b16 %v937
      %v1223 = vunpack.c.h.b16 %v937
      %v1224 = vunpack.c.l.b16 %v938
      %v1225 = vunpack.c.h.b16 %v938
      %v1226 = vunpack.c.l.b16 %v939
      %v1227 = vunpack.c.h.b16 %v939
      %v1228 = vunpack.c.l.b16 %v940
      %v1229 = vunpack.c.h.b16 %v940
      %v1230 = vunpack.c.l.b16 %v941
      %v1231 = vunpack.c.h.b16 %v941
      %v1232 = vunpack.c.l.b16 %v942
      %v1233 = vunpack.c.h.b16 %v942
      %v1234 = vunpack.c.l.b16 %v943
      %v1235 = vunpack.c.h.b16 %v943
      %v1236 = vunpack.c.l.b16 %v944
      %v1237 = vunpack.c.h.b16 %v944
      %v1238 = vunpack.c.l.b16 %v945
      %v1239 = vunpack.c.h.b16 %v945
      %v1240 = vunpack.c.l.b16 %v946
      %v1241 = vunpack.c.h.b16 %v946
      %v1242 = vunpack.c.l.b16 %v947
      %v1243 = vunpack.c.h.b16 %v947
      %v1244 = vunpack.c.l.b16 %v948
      %v1245 = vunpack.c.h.b16 %v948
      %v1246 = vunpack.c.l.b16 %v949
      %v1247 = vunpack.c.h.b16 %v949
      %v1248 = vunpack.c.l.b16 %v950
      %v1249 = vunpack.c.h.b16 %v950
      %v1250 = vunpack.c.l.b16 %v951
      %v1251 = vunpack.c.h.b16 %v951
      %v1252 = vunpack.c.l.b16 %v952
      %v1253 = vunpack.c.h.b16 %v952
      %v1254 = vunpack.c.l.b16 %v953
      %v1255 = vunpack.c.h.b16 %v953
      %v1256 = vunpack.c.l.b16 %v954
      %v1257 = vunpack.c.h.b16 %v954
      %v1258 = vunpack.c.l.b16 %v955
      %v1259 = vunpack.c.h.b16 %v955
      %v1260 = vunpack.c.l.b16 %v956
      %v1261 = vunpack.c.h.b16 %v956
      %v1262 = vunpack.c.l.b16 %v957
      %v1263 = vunpack.c.h.b16 %v957
      %v1264 = vunpack.c.l.b16 %v958
      %v1265 = vunpack.c.h.b16 %v958
      %v1266 = vunpack.c.l.b16 %v959
      %v1267 = vunpack.c.h.b16 %v959
      %v1268 = vunpack.c.l.b16 %v960
      %v1269 = vunpack.c.h.b16 %v960
      %v1270 = vunpack.c.l.b16 %v961
      %v1271 = vunpack.c.h.b16 %v961
      %v1272 = vunpack.c.l.b16 %v962
      %v1273 = vunpack.c.h.b16 %v962
      %v1274 = vunpack.c.l.b16 %v963
      %v1275 = vunpack.c.h.b16 %v963
      %v1276 = vunpack.c.l.b16 %v964
      %v1277 = vunpack.c.h.b16 %v964
      %v1278 = vunpack.c.l.b16 %v965
      %v1279 = vunpack.c.h.b16 %v965
      %v1280 = vunpack.c.l.b16 %v966
      %v1281 = vunpack.c.h.b16 %v966
      %v1282 = vunpack.c.l.b16 %v967
      %v1283 = vunpack.c.h.b16 %v967
      %v1284 = vunpack.c.l.b16 %v968
      %v1285 = vunpack.c.h.b16 %v968
      %v1286 = vunpack.c.l.b16 %v969
      %v1287 = vunpack.c.h.b16 %v969
      %v1288 = vunpack.c.l.b16 %v970
      %v1289 = vunpack.c.h.b16 %v970
      %v1290 = vunpack.c.l.b16 %v971
      %v1291 = vunpack.c.h.b16 %v971
      %v1292 = vunpack.c.l.b16 %v972
      %v1293 = vunpack.c.h.b16 %v972
      %v1294 = vunpack.c.l.b16 %v973
      %v1295 = vunpack.c.h.b16 %v973
      %v1296 = vunpack.c.l.b16 %v974
      %v1297 = vunpack.c.h.b16 %v974
      %v1298 = vunpack.c.l.b16 %v975
      %v1299 = vunpack.c.h.b16 %v975
      %v1300 = vunpack.c.l.b16 %v976
      %v1301 = vunpack.c.h.b16 %v976
      %v1302 = vunpack.c.l.b16 %v977
      %v1303 = vunpack.c.h.b16 %v977
      %v1304 = vunpack.c.l.b16 %v978
      %v1305 = vunpack.c.h.b16 %v978
      %v1306 = vunpack.c.l.b16 %v979
      %v1307 = vunpack.c.h.b16 %v979
      %v1308 = vunpack.c.l.b16 %v980
      %v1309 = vunpack.c.h.b16 %v980
      %v1310 = vunpack.c.l.b16 %v981
      %v1311 = vunpack.c.h.b16 %v981
      %v1312 = vunpack.c.l.b16 %v982
      %v1313 = vunpack.c.h.b16 %v982
      %v1314 = vunpack.c.l.b16 %v983
      %v1315 = vunpack.c.h.b16 %v983
      %v1316 = vunpack.c.l.b16 %v984
      %v1317 = vunpack.c.h.b16 %v984
      %v1318 = vunpack.c.l.b16 %v985
      %v1319 = vunpack.c.h.b16 %v985
      %v1320 = vunpack.c.l.b16 %v986
      %v1321 = vunpack.c.h.b16 %v986
      %v1322 = vunpack.c.l.b16 %v987
      %v1323 = vunpack.c.h.b16 %v987
      %v1324 = vunpack.c.l.b16 %v988
      %v1325 = vunpack.c.h.b16 %v988
      %v1326 = vunpack.c.l.b16 %v989
      %v1327 = vunpack.c.h.b16 %v989
      %v1328 = vunpack.c.l.b16 %v990
      %v1329 = vunpack.c.h.b16 %v990
      %v1330 = vunpack.c.l.b16 %v991
      %v1331 = vunpack.c.h.b16 %v991
      %v1332 = vunpack.c.l.b16 %v992
      %v1333 = vunpack.c.h.b16 %v992
      %v1334 = vunpack.c.l.b16 %v993
      %v1335 = vunpack.c.h.b16 %v993
      %v1336 = vunpack.c.l.b16 %v994
      %v1337 = vunpack.c.h.b16 %v994
      %v1338 = vunpack.c.l.b16 %v995
      %v1339 = vunpack.c.h.b16 %v995
      %v1340 = vunpack.c.l.b16 %v996
      %v1341 = vunpack.c.h.b16 %v996
      %v1342 = vunpack.c.l.b16 %v997
      %v1343 = vunpack.c.h.b16 %v997
      %v1344 = vunpack.c.l.b16 %v998
      %v1345 = vunpack.c.h.b16 %v998
      %v1346 = vunpack.c.l.b16 %v999
      %v1347 = vunpack.c.h.b16 %v999
      %v1348 = vunpack.c.l.b16 %v1000
      %v1349 = vunpack.c.h.b16 %v1000
      %v1350 = vunpack.c.l.b16 %v1001
      %v1351 = vunpack.c.h.b16 %v1001
      %v1352 = vunpack.c.l.b16 %v1002
      %v1353 = vunpack.c.h.b16 %v1002
      %v1354 = vunpack.c.l.b16 %v1003
      %v1355 = vunpack.c.h.b16 %v1003
      %v1356 = vunpack.c.l.b16 %v1004
      %v1357 = vunpack.c.h.b16 %v1004
      %v1358 = vunpack.c.l.b16 %v1005
      %v1359 = vunpack.c.h.b16 %v1005
      %v1360 = vunpack.c.l.b16 %v1006
      %v1361 = vunpack.c.h.b16 %v1006
      %v1362 = vunpack.c.l.b16 %v1007
      %v1363 = vunpack.c.h.b16 %v1007
      %v1364 = vunpack.c.l.b16 %v1008
      %v1365 = vunpack.c.h.b16 %v1008
      %v1366 = vunpack.c.l.b16 %v1009
      %v1367 = vunpack.c.h.b16 %v1009
      %v1368 = vunpack.c.l.b16 %v1010
      %v1369 = vunpack.c.h.b16 %v1010
      %v1370 = vunpack.c.l.b16 %v1011
      %v1371 = vunpack.c.h.b16 %v1011
      %v1372 = vunpack.c.l.b16 %v1012
      %v1373 = vunpack.c.h.b16 %v1012
      %v1374 = vunpack.c.l.b16 %v1013
      %v1375 = vunpack.c.h.b16 %v1013
      %v1376 = vunpack.c.l.b16 %v1014
      %v1377 = vunpack.c.h.b16 %v1014
      %v1378 = vunpack.c.l.b16 %v1015
      %v1379 = vunpack.c.h.b16 %v1015
      %v1380 = vunpack.c.l.b16 %v1016
      %v1381 = vunpack.c.h.b16 %v1016
      %v1382 = vunpack.c.l.b16 %v1017
      %v1383 = vunpack.c.h.b16 %v1017
      %v1384 = vunpack.c.l.b16 %v1018
      %v1385 = vunpack.c.h.b16 %v1018
      %v1386 = vunpack.c.l.b16 %v1019
      %v1387 = vunpack.c.h.b16 %v1019
      %v1388 = vunpack.c.l.b16 %v1020
      %v1389 = vunpack.c.h.b16 %v1020
      %v1390 = vunpack.c.l.b16 %v1021
      %v1391 = vunpack.c.h.b16 %v1021
      %v1392 = vunpack.c.l.b16 %v1022
      %v1393 = vunpack.c.h.b16 %v1022
      %v1394 = vunpack.c.l.b16 %v1023
      %v1395 = vunpack.c.h.b16 %v1023
      %v1396 = vunpack.c.l.b16 %v1024
      %v1397 = vunpack.c.h.b16 %v1024
      %v1398 = vunpack.c.l.b16 %v1025
      %v1399 = vunpack.c.h.b16 %v1025
      %v1400 = vunpack.c.l.b16 %v1026
      %v1401 = vunpack.c.h.b16 %v1026
      %v1402 = vunpack.c.l.b16 %v1027
      %v1403 = vunpack.c.h.b16 %v1027
      %v1404 = vunpack.c.l.b16 %v1028
      %v1405 = vunpack.c.h.b16 %v1028
      %v1406 = vunpack.c.l.b16 %v1029
      %v1407 = vunpack.c.h.b16 %v1029
      %v1408 = vunpack.c.l.b16 %v1030
      %v1409 = vunpack.c.h.b16 %v1030
      %v1410 = vunpack.c.l.b16 %v1031
      %v1411 = vunpack.c.h.b16 %v1031
      %v1412 = vunpack.c.l.b16 %v1032
      %v1413 = vunpack.c.h.b16 %v1032
      %v1414 = vunpack.c.l.b16 %v1033
      %v1415 = vunpack.c.h.b16 %v1033
      %v1416 = vunpack.c.l.b16 %v1034
      %v1417 = vunpack.c.h.b16 %v1034
      %v1418 = vunpack.c.l.b16 %v1035
      %v1419 = vunpack.c.h.b16 %v1035
      %v1420 = vunpack.c.l.b16 %v1036
      %v1421 = vunpack.c.h.b16 %v1036
      %v1422 = vunpack.c.l.b16 %v1037
      %v1423 = vunpack.c.h.b16 %v1037
      %v1424 = vunpack.c.l.b16 %v1038
      %v1425 = vunpack.c.h.b16 %v1038
      %v1426 = vunpack.c.l.b16 %v1039
      %v1427 = vunpack.c.h.b16 %v1039
      %v1428 = vunpack.c.l.b16 %v1040
      %v1429 = vunpack.c.h.b16 %v1040
      %v1430 = vunpack.c.l.b16 %v1041
      %v1431 = vunpack.c.h.b16 %v1041
      %v1432 = vunpack.c.l.b16 %v1042
      %v1433 = vunpack.c.h.b16 %v1042
      %v1434 = vunpack.c.l.b16 %v1043
      %v1435 = vunpack.c.h.b16 %v1043
      %v1436 = vunpack.c.l.b16 %v1044
      %v1437 = vunpack.c.h.b16 %v1044
      %v1438 = vunpack.c.l.b16 %v1045
      %v1439 = vunpack.c.h.b16 %v1045
      %v1440 = vunpack.c.l.b16 %v1046
      %v1441 = vunpack.c.h.b16 %v1046
      %v1442 = vunpack.c.l.b16 %v1047
      %v1443 = vunpack.c.h.b16 %v1047
      %v1444 = vunpack.c.l.b16 %v1048
      %v1445 = vunpack.c.h.b16 %v1048
      %v1446 = vunpack.c.l.b16 %v1049
      %v1447 = vunpack.c.h.b16 %v1049
      %v1448 = vunpack.c.l.b16 %v1050
      %v1449 = vunpack.c.h.b16 %v1050
      %v1450 = vunpack.c.l.b16 %v1051
      %v1451 = vunpack.c.h.b16 %v1051
      %v1452 = vunpack.c.l.b16 %v1052
      %v1453 = vunpack.c.h.b16 %v1052
      %v1454 = vunpack.c.l.b16 %v1053
      %v1455 = vunpack.c.h.b16 %v1053
      %v1456 = vunpack.c.l.b16 %v1054
      %v1457 = vunpack.c.h.b16 %v1054
      %v1458 = vunpack.c.l.b16 %v1055
      %v1459 = vunpack.c.h.b16 %v1055
      %v1460 = vunpack.c.l.b16 %v1056
      %v1461 = vunpack.c.h.b16 %v1056
      %v1462 = vunpack.c.l.b16 %v1057
      %v1463 = vunpack.c.h.b16 %v1057
      %v1464 = vpack.c.b16 %v1212, %v1208
      %v1465 = vpack.c.b16 %v1213, %v1209
      %v1466 = vpack.c.b16 %v1214, %v1210
      %v1467 = vpack.c.b16 %v1215, %v1211
      %v1468 = vpack.c.b16 %v1220, %v1216
      %v1469 = vpack.c.b16 %v1221, %v1217
      %v1470 = vpack.c.b16 %v1222, %v1218
      %v1471 = vpack.c.b16 %v1223, %v1219
      %v1472 = vpack.c.b16 %v1228, %v1224
      %v1473 = vpack.c.b16 %v1229, %v1225
      %v1474 = vpack.c.b16 %v1230, %v1226
      %v1475 = vpack.c.b16 %v1231, %v1227
      %v1476 = vpack.c.b16 %v1236, %v1232
      %v1477 = vpack.c.b16 %v1237, %v1233
      %v1478 = vpack.c.b16 %v1238, %v1234
      %v1479 = vpack.c.b16 %v1239, %v1235
      %v1480 = vpack.c.b16 %v1244, %v1240
      %v1481 = vpack.c.b16 %v1245, %v1241
      %v1482 = vpack.c.b16 %v1246, %v1242
      %v1483 = vpack.c.b16 %v1247, %v1243
      %v1484 = vpack.c.b16 %v1252, %v1248
      %v1485 = vpack.c.b16 %v1253, %v1249
      %v1486 = vpack.c.b16 %v1254, %v1250
      %v1487 = vpack.c.b16 %v1255, %v1251
      %v1488 = vpack.c.b16 %v1260, %v1256
      %v1489 = vpack.c.b16 %v1261, %v1257
      %v1490 = vpack.c.b16 %v1262, %v1258
      %v1491 = vpack.c.b16 %v1263, %v1259
      %v1492 = vpack.c.b16 %v1268, %v1264
      %v1493 = vpack.c.b16 %v1269, %v1265
      %v1494 = vpack.c.b16 %v1270, %v1266
      %v1495 = vpack.c.b16 %v1271, %v1267
      %v1496 = vpack.c.b16 %v1276, %v1272
      %v1497 = vpack.c.b16 %v1277, %v1273
      %v1498 = vpack.c.b16 %v1278, %v1274
      %v1499 = vpack.c.b16 %v1279, %v1275
      %v1500 = vpack.c.b16 %v1284, %v1280
      %v1501 = vpack.c.b16 %v1285, %v1281
      %v1502 = vpack.c.b16 %v1286, %v1282
      %v1503 = vpack.c.b16 %v1287, %v1283
      %v1504 = vpack.c.b16 %v1292, %v1288
      %v1505 = vpack.c.b16 %v1293, %v1289
      %v1506 = vpack.c.b16 %v1294, %v1290
      %v1507 = vpack.c.b16 %v1295, %v1291
      %v1508 = vpack.c.b16 %v1300, %v1296
      %v1509 = vpack.c.b16 %v1301, %v1297
      %v1510 = vpack.c.b16 %v1302, %v1298
      %v1511 = vpack.c.b16 %v1303, %v1299
      %v1512 = vpack.c.b16 %v1308, %v1304
      %v1513 = vpack.c.b16 %v1309, %v1305
      %v1514 = vpack.c.b16 %v1310, %v1306
      %v1515 = vpack.c.b16 %v1311, %v1307
      %v1516 = vpack.c.b16 %v1316, %v1312
      %v1517 = vpack.c.b16 %v1317, %v1313
      %v1518 = vpack.c.b16 %v1318, %v1314
      %v1519 = vpack.c.b16 %v1319, %v1315
      %v1520 = vpack.c.b16 %v1324, %v1320
      %v1521 = vpack.c.b16 %v1325, %v1321
      %v1522 = vpack.c.b16 %v1326, %v1322
      %v1523 = vpack.c.b16 %v1327, %v1323
      %v1524 = vpack.c.b16 %v1332, %v1328
      %v1525 = vpack.c.b16 %v1333, %v1329
      %v1526 = vpack.c.b16 %v1334, %v1330
      %v1527 = vpack.c.b16 %v1335, %v1331
      %v1528 = vpack.c.b16 %v1340, %v1336
      %v1529 = vpack.c.b16 %v1341, %v1337
      %v1530 = vpack.c.b16 %v1342, %v1338
      %v1531 = vpack.c.b16 %v1343, %v1339
      %v1532 = vpack.c.b16 %v1348, %v1344
      %v1533 = vpack.c.b16 %v1349, %v1345
      %v1534 = vpack.c.b16 %v1350, %v1346
      %v1535 = vpack.c.b16 %v1351, %v1347
      %v1536 = vpack.c.b16 %v1356, %v1352
      %v1537 = vpack.c.b16 %v1357, %v1353
      %v1538 = vpack.c.b16 %v1358, %v1354
      %v1539 = vpack.c.b16 %v1359, %v1355
      %v1540 = vpack.c.b16 %v1364, %v1360
      %v1541 = vpack.c.b16 %v1365, %v1361
      %v1542 = vpack.c.b16 %v1366, %v1362
      %v1543 = vpack.c.b16 %v1367, %v1363
      %v1544 = vpack.c.b16 %v1372, %v1368
      %v1545 = vpack.c.b16 %v1373, %v1369
      %v1546 = vpack.c.b16 %v1374, %v1370
      %v1547 = vpack.c.b16 %v1375, %v1371
      %v1548 = vpack.c.b16 %v1380, %v1376
      %v1549 = vpack.c.b16 %v1381, %v1377
      %v1550 = vpack.c.b16 %v1382, %v1378
      %v1551 = vpack.c.b16 %v1383, %v1379
      %v1552 = vpack.c.b16 %v1388, %v1384
      %v1553 = vpack.c.b16 %v1389, %v1385
      %v1554 = vpack.c.b16 %v1390, %v1386
      %v1555 = vpack.c.b16 %v1391, %v1387
      %v1556 = vpack.c.b16 %v1396, %v1392
      %v1557 = vpack.c.b16 %v1397, %v1393
      %v1558 = vpack.c.b16 %v1398, %v1394
      %v1559 = vpack.c.b16 %v1399, %v1395
      %v1560 = vpack.c.b16 %v1404, %v1400
      %v1561 = vpack.c.b16 %v1405, %v1401
      %v1562 = vpack.c.b16 %v1406, %v1402
      %v1563 = vpack.c.b16 %v1407, %v1403
      %v1564 = vpack.c.b16 %v1412, %v1408
      %v1565 = vpack.c.b16 %v1413, %v1409
      %v1566 = vpack.c.b16 %v1414, %v1410
      %v1567 = vpack.c.b16 %v1415, %v1411
      %v1568 = vpack.c.b16 %v1420, %v1416
      %v1569 = vpack.c.b16 %v1421, %v1417
      %v1570 = vpack.c.b16 %v1422, %v1418
      %v1571 = vpack.c.b16 %v1423, %v1419
      %v1572 = vpack.c.b16 %v1428, %v1424
      %v1573 = vpack.c.b16 %v1429, %v1425
      %v1574 = vpack.c.b16 %v1430, %v1426
      %v1575 = vpack.c.b16 %v1431, %v1427
      %v1576 = vpack.c.b16 %v1436, %v1432
      %v1577 = vpack.c.b16 %v1437, %v1433
      %v1578 = vpack.c.b16 %v1438, %v1434
      %v1579 = vpack.c.b16 %v1439, %v1435
      %v1580 = vpack.c.b16 %v1444, %v1440
      %v1581 = vpack.c.b16 %v1445, %v1441
      %v1582 = vpack.c.b16 %v1446, %v1442
      %v1583 = vpack.c.b16 %v1447, %v1443
      %v1584 = vpack.c.b16 %v1452, %v1448
      %v1585 = vpack.c.b16 %v1453, %v1449
      %v1586 = vpack.c.b16 %v1454, %v1450
      %v1587 = vpack.c.b16 %v1455, %v1451
      %v1588 = vpack.c.b16 %v1460, %v1456
      %v1589 = vpack.c.b16 %v1461, %v1457
      %v1590 = vpack.c.b16 %v1462, %v1458
      %v1591 = vpack.c.b16 %v1463, %v1459
      %1720 = vmatprep.subr.bf16.mxu0 %v1493
      %1721 = vmatpush1.bf16.msra.mxu0 %v1492
      %1722 = vmatprep.subr.bf16.mxu0 %v1489
      %1723 = vmatpush1.bf16.msra.mxu0 %v1488
      %1724 = vmatprep.subr.bf16.mxu0 %v1485
      %1725 = vmatpush1.bf16.msra.mxu0 %v1484
      %1726 = vmatprep.subr.bf16.mxu0 %v1481
      %1727 = vmatpush1.bf16.msra.mxu0 %v1480
      %1728 = vmatprep.subr.bf16.mxu0 %v1477
      %1729 = vmatpush1.bf16.msra.mxu0 %v1476
      %1730 = vmatprep.subr.bf16.mxu0 %v1473
      %1731 = vmatpush1.bf16.msra.mxu0 %v1472
      %1732 = vmatprep.subr.bf16.mxu0 %v1469
      %1733 = vmatpush1.bf16.msra.mxu0 %v1468
      %1734 = vmatprep.subr.bf16.mxu0 %v1465
      %1735 = vmatpush1.bf16.msra.mxu0 %v1464
      %1736 = vmatprep.subr.bf16.mxu0 %v1525
      %1737 = vmatpush2.bf16.msra.mxu0 %v1524
      %1738 = vmatprep.subr.bf16.mxu0 %v1521
      %1739 = vmatpush2.bf16.msra.mxu0 %v1520
      %1740 = vmatprep.subr.bf16.mxu0 %v1517
      %1741 = vmatpush2.bf16.msra.mxu0 %v1516
      %1742 = vmatprep.subr.bf16.mxu0 %v1513
      %1743 = vmatpush2.bf16.msra.mxu0 %v1512
      %1744 = vmatprep.subr.bf16.mxu0 %v1509
      %1745 = vmatpush2.bf16.msra.mxu0 %v1508
      %1746 = vmatprep.subr.bf16.mxu0 %v1505
      %1747 = vmatpush2.bf16.msra.mxu0 %v1504
      %1748 = vmatprep.subr.bf16.mxu0 %v1501
      %1749 = vmatpush2.bf16.msra.mxu0 %v1500
      %1750 = vmatprep.subr.bf16.mxu0 %v1497
      %1751 = vmatpush2.bf16.msra.mxu0 %v1496
      %1752 = vmatprep.mubr.bf16.mxu0 %v923
      %1753 = vmatmul.mubr.bf16.gmra.mxu0 %v922
      %v1754 = vpop.f32.mrf.mxu0
      %v1755 = vadd.f32 %v1063, %v1754
      %v1756 = vpop.f32.mrf.mxu0
      %v1757 = vadd.f32 %v1067, %v1756
      %v1758 = vpop.f32.mrf.mxu0
      %v1759 = vadd.f32 %v1063, %v1758
      %v1760 = vpop.f32.mrf.mxu0
      %v1761 = vadd.f32 %v1067, %v1760
      %1762 = vmatprep.mubr.bf16.mxu0 %v927
      %1763 = vmatmul.mubr.bf16.gmra.mxu0 %v926
      %v1764 = vpop.f32.mrf.mxu0
      %v1765 = vadd.f32 %v1063, %v1764
      %v1766 = vpop.f32.mrf.mxu0
      %v1767 = vadd.f32 %v1067, %v1766
      %v1768 = vpop.f32.mrf.mxu0
      %v1769 = vadd.f32 %v1063, %v1768
      %v1770 = vpop.f32.mrf.mxu0
      %v1771 = vadd.f32 %v1067, %v1770
      %1772 = vdwg.mxu0
      %1773 = vmatprep.subr.bf16.mxu0 %v1557
      %1774 = vmatpush1.bf16.msra.mxu0 %v1556
      %1775 = vmatprep.subr.bf16.mxu0 %v1553
      %1776 = vmatpush1.bf16.msra.mxu0 %v1552
      %1777 = vmatprep.subr.bf16.mxu0 %v1549
      %1778 = vmatpush1.bf16.msra.mxu0 %v1548
      %1779 = vmatprep.subr.bf16.mxu0 %v1545
      %1780 = vmatpush1.bf16.msra.mxu0 %v1544
      %1781 = vmatprep.subr.bf16.mxu0 %v1541
      %1782 = vmatpush1.bf16.msra.mxu0 %v1540
      %1783 = vmatprep.subr.bf16.mxu0 %v1537
      %1784 = vmatpush1.bf16.msra.mxu0 %v1536
      %1785 = vmatprep.subr.bf16.mxu0 %v1533
      %1786 = vmatpush1.bf16.msra.mxu0 %v1532
      %1787 = vmatprep.subr.bf16.mxu0 %v1529
      %1788 = vmatpush1.bf16.msra.mxu0 %v1528
      %1789 = vmatprep.subr.bf16.mxu0 %v1589
      %1790 = vmatpush2.bf16.msra.mxu0 %v1588
      %1791 = vmatprep.subr.bf16.mxu0 %v1585
      %1792 = vmatpush2.bf16.msra.mxu0 %v1584
      %1793 = vmatprep.subr.bf16.mxu0 %v1581
      %1794 = vmatpush2.bf16.msra.mxu0 %v1580
      %1795 = vmatprep.subr.bf16.mxu0 %v1577
      %1796 = vmatpush2.bf16.msra.mxu0 %v1576
      %1797 = vmatprep.subr.bf16.mxu0 %v1573
      %1798 = vmatpush2.bf16.msra.mxu0 %v1572
      %1799 = vmatprep.subr.bf16.mxu0 %v1569
      %1800 = vmatpush2.bf16.msra.mxu0 %v1568
      %1801 = vmatprep.subr.bf16.mxu0 %v1565
      %1802 = vmatpush2.bf16.msra.mxu0 %v1564
      %1803 = vmatprep.subr.bf16.mxu0 %v1561
      %1804 = vmatpush2.bf16.msra.mxu0 %v1560
      %1805 = vmatprep.mubr.bf16.mxu0 %v925
      %1806 = vmatmul.mubr.bf16.gmra.mxu0 %v924
      %v1807 = vpop.f32.mrf.mxu0
      %v1808 = vadd.f32 %v1755, %v1807
      %v1809 = vpop.f32.mrf.mxu0
      %v1810 = vadd.f32 %v1757, %v1809
      %v1811 = vpop.f32.mrf.mxu0
      %v1812 = vadd.f32 %v1759, %v1811
      %v1813 = vpop.f32.mrf.mxu0
      %v1814 = vadd.f32 %v1761, %v1813
      %1815 = vmatprep.mubr.bf16.mxu0 %v929
      %1816 = vmatmul.mubr.bf16.gmra.mxu0 %v928
      %v1817 = vpop.f32.mrf.mxu0
      %v1818 = vadd.f32 %v1765, %v1817
      %v1819 = vpop.f32.mrf.mxu0
      %v1820 = vadd.f32 %v1767, %v1819
      %v1821 = vpop.f32.mrf.mxu0
      %v1822 = vadd.f32 %v1769, %v1821
      %v1823 = vpop.f32.mrf.mxu0
      %v1824 = vadd.f32 %v1771, %v1823
      %1825 = vdwg.mxu0
      %1826 = vmatprep.subr.bf16.mxu0 %v1495
      %1827 = vmatpush1.bf16.msra.mxu0 %v1494
      %1828 = vmatprep.subr.bf16.mxu0 %v1491
      %1829 = vmatpush1.bf16.msra.mxu0 %v1490
      %1830 = vmatprep.subr.bf16.mxu0 %v1487
      %1831 = vmatpush1.bf16.msra.mxu0 %v1486
      %1832 = vmatprep.subr.bf16.mxu0 %v1483
      %1833 = vmatpush1.bf16.msra.mxu0 %v1482
      %1834 = vmatprep.subr.bf16.mxu0 %v1479
      %1835 = vmatpush1.bf16.msra.mxu0 %v1478
      %1836 = vmatprep.subr.bf16.mxu0 %v1475
      %1837 = vmatpush1.bf16.msra.mxu0 %v1474
      %1838 = vmatprep.subr.bf16.mxu0 %v1471
      %1839 = vmatpush1.bf16.msra.mxu0 %v1470
      %1840 = vmatprep.subr.bf16.mxu0 %v1467
      %1841 = vmatpush1.bf16.msra.mxu0 %v1466
      %1842 = vmatprep.subr.bf16.mxu0 %v1527
      %1843 = vmatpush2.bf16.msra.mxu0 %v1526
      %1844 = vmatprep.subr.bf16.mxu0 %v1523
      %1845 = vmatpush2.bf16.msra.mxu0 %v1522
      %1846 = vmatprep.subr.bf16.mxu0 %v1519
      %1847 = vmatpush2.bf16.msra.mxu0 %v1518
      %1848 = vmatprep.subr.bf16.mxu0 %v1515
      %1849 = vmatpush2.bf16.msra.mxu0 %v1514
      %1850 = vmatprep.subr.bf16.mxu0 %v1511
      %1851 = vmatpush2.bf16.msra.mxu0 %v1510
      %1852 = vmatprep.subr.bf16.mxu0 %v1507
      %1853 = vmatpush2.bf16.msra.mxu0 %v1506
      %1854 = vmatprep.subr.bf16.mxu0 %v1503
      %1855 = vmatpush2.bf16.msra.mxu0 %v1502
      %1856 = vmatprep.subr.bf16.mxu0 %v1499
      %1857 = vmatpush2.bf16.msra.mxu0 %v1498
      %1858 = vmatprep.mubr.bf16.mxu0 %v923
      %1859 = vmatmul.mubr.bf16.gmra.mxu0 %v922
      %v1860 = vpop.f32.mrf.mxu0
      %v1861 = vadd.f32 %v1071, %v1860
      %v1862 = vpop.f32.mrf.mxu0
      %v1863 = vadd.f32 %v1075, %v1862
      %v1864 = vpop.f32.mrf.mxu0
      %v1865 = vadd.f32 %v1071, %v1864
      %v1866 = vpop.f32.mrf.mxu0
      %v1867 = vadd.f32 %v1075, %v1866
      %1868 = vmatprep.mubr.bf16.mxu0 %v927
      %1869 = vmatmul.mubr.bf16.gmra.mxu0 %v926
      %v1870 = vpop.f32.mrf.mxu0
      %v1871 = vadd.f32 %v1071, %v1870
      %v1872 = vpop.f32.mrf.mxu0
      %v1873 = vadd.f32 %v1075, %v1872
      %v1874 = vpop.f32.mrf.mxu0
      %v1875 = vadd.f32 %v1071, %v1874
      %v1876 = vpop.f32.mrf.mxu0
      %v1877 = vadd.f32 %v1075, %v1876
      %1878 = vdwg.mxu0
      %1879 = vmatprep.subr.bf16.mxu0 %v1559
      %1880 = vmatpush1.bf16.msra.mxu0 %v1558
      %1881 = vmatprep.subr.bf16.mxu0 %v1555
      %1882 = vmatpush1.bf16.msra.mxu0 %v1554
      %1883 = vmatprep.subr.bf16.mxu0 %v1551
      %1884 = vmatpush1.bf16.msra.mxu0 %v1550
      %1885 = vmatprep.subr.bf16.mxu0 %v1547
      %1886 = vmatpush1.bf16.msra.mxu0 %v1546
      %1887 = vmatprep.subr.bf16.mxu0 %v1543
      %1888 = vmatpush1.bf16.msra.mxu0 %v1542
      %1889 = vmatprep.subr.bf16.mxu0 %v1539
      %1890 = vmatpush1.bf16.msra.mxu0 %v1538
      %1891 = vmatprep.subr.bf16.mxu0 %v1535
      %1892 = vmatpush1.bf16.msra.mxu0 %v1534
      %1893 = vmatprep.subr.bf16.mxu0 %v1531
      %1894 = vmatpush1.bf16.msra.mxu0 %v1530
      %1895 = vmatprep.subr.bf16.mxu0 %v1591
      %1896 = vmatpush2.bf16.msra.mxu0 %v1590
      %1897 = vmatprep.subr.bf16.mxu0 %v1587
      %1898 = vmatpush2.bf16.msra.mxu0 %v1586
      %1899 = vmatprep.subr.bf16.mxu0 %v1583
      %1900 = vmatpush2.bf16.msra.mxu0 %v1582
      %1901 = vmatprep.subr.bf16.mxu0 %v1579
      %1902 = vmatpush2.bf16.msra.mxu0 %v1578
      %1903 = vmatprep.subr.bf16.mxu0 %v1575
      %1904 = vmatpush2.bf16.msra.mxu0 %v1574
      %1905 = vmatprep.subr.bf16.mxu0 %v1571
      %1906 = vmatpush2.bf16.msra.mxu0 %v1570
      %1907 = vmatprep.subr.bf16.mxu0 %v1567
      %1908 = vmatpush2.bf16.msra.mxu0 %v1566
      %1909 = vmatprep.subr.bf16.mxu0 %v1563
      %1910 = vmatpush2.bf16.msra.mxu0 %v1562
      %1911 = vmatprep.mubr.bf16.mxu0 %v925
      %1912 = vmatmul.mubr.bf16.gmra.mxu0 %v924
      %v1913 = vpop.f32.mrf.mxu0
      %v1914 = vadd.f32 %v1861, %v1913
      %v1915 = vpop.f32.mrf.mxu0
      %v1916 = vadd.f32 %v1863, %v1915
      %v1917 = vpop.f32.mrf.mxu0
      %v1918 = vadd.f32 %v1865, %v1917
      %v1919 = vpop.f32.mrf.mxu0
      %v1920 = vadd.f32 %v1867, %v1919
      %1921 = vmatprep.mubr.bf16.mxu0 %v929
      %1922 = vmatmul.mubr.bf16.gmra.mxu0 %v928
      %v1923 = vpop.f32.mrf.mxu0
      %v1924 = vadd.f32 %v1871, %v1923
      %v1925 = vpop.f32.mrf.mxu0
      %v1926 = vadd.f32 %v1873, %v1925
      %v1927 = vpop.f32.mrf.mxu0
      %v1928 = vadd.f32 %v1875, %v1927
      %v1929 = vpop.f32.mrf.mxu0
      %v1930 = vadd.f32 %v1877, %v1929
      %1931 = vdwg.mxu0
      %v1932 = vxor.u32 %v1808, 2147483648
      %v1933 = vxor.u32 %v1810, 2147483648
      %v1934 = vxor.u32 %v1914, 2147483648
      %v1935 = vxor.u32 %v1916, 2147483648
      %v1936 = vxor.u32 %v1812, 2147483648
      %v1937 = vxor.u32 %v1814, 2147483648
      %v1938 = vxor.u32 %v1918, 2147483648
      %v1939 = vxor.u32 %v1920, 2147483648
      %v1940 = vxor.u32 %v1818, 2147483648
      %v1941 = vxor.u32 %v1820, 2147483648
      %v1942 = vxor.u32 %v1924, 2147483648
      %v1943 = vxor.u32 %v1926, 2147483648
      %v1944 = vxor.u32 %v1822, 2147483648
      %v1945 = vxor.u32 %v1824, 2147483648
      %v1946 = vxor.u32 %v1928, 2147483648
      %v1947 = vxor.u32 %v1930, 2147483648
      %v1948 = vmul.f32 %v1932, 1.442695
      %v1949 = vpow.pop %v1948
      %v1950 = vmul.f32 %v1933, 1.442695
      %v1951 = vpow.pop %v1950
      %v1952 = vmul.f32 %v1934, 1.442695
      %v1953 = vpow.pop %v1952
      %v1954 = vmul.f32 %v1935, 1.442695
      %v1955 = vpow.pop %v1954
      %v1956 = vmul.f32 %v1936, 1.442695
      %v1957 = vpow.pop %v1956
      %v1958 = vmul.f32 %v1937, 1.442695
      %v1959 = vpow.pop %v1958
      %v1960 = vmul.f32 %v1938, 1.442695
      %v1961 = vpow.pop %v1960
      %v1962 = vmul.f32 %v1939, 1.442695
      %v1963 = vpow.pop %v1962
      %v1964 = vmul.f32 %v1940, 1.442695
      %v1965 = vpow.pop %v1964
      %v1966 = vmul.f32 %v1941, 1.442695
      %v1967 = vpow.pop %v1966
      %v1968 = vmul.f32 %v1942, 1.442695
      %v1969 = vpow.pop %v1968
      %v1970 = vmul.f32 %v1943, 1.442695
      %v1971 = vpow.pop %v1970
      %v1972 = vmul.f32 %v1944, 1.442695
      %v1973 = vpow.pop %v1972
      %v1974 = vmul.f32 %v1945, 1.442695
      %v1975 = vpow.pop %v1974
      %v1976 = vmul.f32 %v1946, 1.442695
      %v1977 = vpow.pop %v1976
      %v1978 = vmul.f32 %v1947, 1.442695
      %v1979 = vpow.pop %v1978
      %v1980 = vadd.f32 %v1949, 1.0
      %v1981 = vadd.f32 %v1951, 1.0
      %v1982 = vadd.f32 %v1953, 1.0
      %v1983 = vadd.f32 %v1955, 1.0
      %v1984 = vadd.f32 %v1957, 1.0
      %v1985 = vadd.f32 %v1959, 1.0
      %v1986 = vadd.f32 %v1961, 1.0
      %v1987 = vadd.f32 %v1963, 1.0
      %v1988 = vadd.f32 %v1965, 1.0
      %v1989 = vadd.f32 %v1967, 1.0
      %v1990 = vadd.f32 %v1969, 1.0
      %v1991 = vadd.f32 %v1971, 1.0
      %v1992 = vadd.f32 %v1973, 1.0
      %v1993 = vadd.f32 %v1975, 1.0
      %v1994 = vadd.f32 %v1977, 1.0
      %v1995 = vadd.f32 %v1979, 1.0
      %v1996 = vrcp.pop %v1980
      %v1997 = vmul.f32 1.0, %v1996
      %v1998 = vrcp.pop %v1981
      %v1999 = vmul.f32 1.0, %v1998
      %v2000 = vrcp.pop %v1982
      %v2001 = vmul.f32 1.0, %v2000
      %v2002 = vrcp.pop %v1983
      %v2003 = vmul.f32 1.0, %v2002
      %v2004 = vrcp.pop %v1984
      %v2005 = vmul.f32 1.0, %v2004
      %v2006 = vrcp.pop %v1985
      %v2007 = vmul.f32 1.0, %v2006
      %v2008 = vrcp.pop %v1986
      %v2009 = vmul.f32 1.0, %v2008
      %v2010 = vrcp.pop %v1987
      %v2011 = vmul.f32 1.0, %v2010
      %v2012 = vrcp.pop %v1988
      %v2013 = vmul.f32 1.0, %v2012
      %v2014 = vrcp.pop %v1989
      %v2015 = vmul.f32 1.0, %v2014
      %v2016 = vrcp.pop %v1990
      %v2017 = vmul.f32 1.0, %v2016
      %v2018 = vrcp.pop %v1991
      %v2019 = vmul.f32 1.0, %v2018
      %v2020 = vrcp.pop %v1992
      %v2021 = vmul.f32 1.0, %v2020
      %v2022 = vrcp.pop %v1993
      %v2023 = vmul.f32 1.0, %v2022
      %v2024 = vrcp.pop %v1994
      %v2025 = vmul.f32 1.0, %v2024
      %v2026 = vrcp.pop %v1995
      %v2027 = vmul.f32 1.0, %v2026
      %v2028 = vmul.f32 %v1808, %v1997
      %v2029 = vmul.f32 %v1810, %v1999
      %v2030 = vmul.f32 %v1914, %v2001
      %v2031 = vmul.f32 %v1916, %v2003
      %v2032 = vmul.f32 %v1812, %v2005
      %v2033 = vmul.f32 %v1814, %v2007
      %v2034 = vmul.f32 %v1918, %v2009
      %v2035 = vmul.f32 %v1920, %v2011
      %v2036 = vmul.f32 %v1818, %v2013
      %v2037 = vmul.f32 %v1820, %v2015
      %v2038 = vmul.f32 %v1924, %v2017
      %v2039 = vmul.f32 %v1926, %v2019
      %v2040 = vmul.f32 %v1822, %v2021
      %v2041 = vmul.f32 %v1824, %v2023
      %v2042 = vmul.f32 %v1928, %v2025
      %v2043 = vmul.f32 %v1930, %v2027
      %v2044 = vpack.c.bf16 %v2032, %v2028
      %v2045 = vpack.c.bf16 %v2033, %v2029
      %v2046 = vpack.c.bf16 %v2034, %v2030
      %v2047 = vpack.c.bf16 %v2035, %v2031
      %v2048 = vpack.c.bf16 %v2040, %v2036
      %v2049 = vpack.c.bf16 %v2041, %v2037
      %v2050 = vpack.c.bf16 %v2042, %v2038
      %v2051 = vpack.c.bf16 %v2043, %v2039
      %v2052 = vld [vmem:[%s470] sm:$0xf]
      %v2053 = vld [vmem:[%s470 + $0x4] sm:$0xf]
      %v2054 = vld [vmem:[%s470 + $0x8] sm:$0xf]
      %v2055 = vld [vmem:[%s470 + $0xc] sm:$0xf]
      %v2056 = vld [vmem:[%s470 + $0x10] sm:$0xf]
      %v2057 = vld [vmem:[%s470 + $0x14] sm:$0xf]
      %v2058 = vld [vmem:[%s470 + $0x18] sm:$0xf]
      %v2059 = vld [vmem:[%s470 + $0x1c] sm:$0xf]
      %v2060 = vld [vmem:[%s470 + $0x20] sm:$0xf]
      %v2061 = vld [vmem:[%s470 + $0x24] sm:$0xf]
      %v2062 = vld [vmem:[%s470 + $0x28] sm:$0xf]
      %v2063 = vld [vmem:[%s470 + $0x2c] sm:$0xf]
      %v2064 = vld [vmem:[%s470 + $0x30] sm:$0xf]
      %v2065 = vld [vmem:[%s470 + $0x34] sm:$0xf]
      %v2066 = vld [vmem:[%s470 + $0x38] sm:$0xf]
      %v2067 = vld [vmem:[%s470 + $0x3c] sm:$0xf]
      %v2068 = vld [vmem:[%s470 + $0x40] sm:$0xf]
      %v2069 = vld [vmem:[%s470 + $0x44] sm:$0xf]
      %v2070 = vld [vmem:[%s470 + $0x48] sm:$0xf]
      %v2071 = vld [vmem:[%s470 + $0x4c] sm:$0xf]
      %v2072 = vld [vmem:[%s470 + $0x50] sm:$0xf]
      %v2073 = vld [vmem:[%s470 + $0x54] sm:$0xf]
      %v2074 = vld [vmem:[%s470 + $0x58] sm:$0xf]
      %v2075 = vld [vmem:[%s470 + $0x5c] sm:$0xf]
      %v2076 = vld [vmem:[%s470 + $0x60] sm:$0xf]
      %v2077 = vld [vmem:[%s470 + $0x64] sm:$0xf]
      %v2078 = vld [vmem:[%s470 + $0x68] sm:$0xf]
      %v2079 = vld [vmem:[%s470 + $0x6c] sm:$0xf]
      %v2080 = vld [vmem:[%s470 + $0x70] sm:$0xf]
      %v2081 = vld [vmem:[%s470 + $0x74] sm:$0xf]
      %v2082 = vld [vmem:[%s470 + $0x78] sm:$0xf]
      %v2083 = vld [vmem:[%s470 + $0x7c] sm:$0xf]
      %v2084 = vld [vmem:[%s470 + $0x80] sm:$0xf]
      %v2085 = vld [vmem:[%s470 + $0x84] sm:$0xf]
      %v2086 = vld [vmem:[%s470 + $0x88] sm:$0xf]
      %v2087 = vld [vmem:[%s470 + $0x8c] sm:$0xf]
      %v2088 = vld [vmem:[%s470 + $0x90] sm:$0xf]
      %v2089 = vld [vmem:[%s470 + $0x94] sm:$0xf]
      %v2090 = vld [vmem:[%s470 + $0x98] sm:$0xf]
      %v2091 = vld [vmem:[%s470 + $0x9c] sm:$0xf]
      %v2092 = vld [vmem:[%s470 + $0xa0] sm:$0xf]
      %v2093 = vld [vmem:[%s470 + $0xa4] sm:$0xf]
      %v2094 = vld [vmem:[%s470 + $0xa8] sm:$0xf]
      %v2095 = vld [vmem:[%s470 + $0xac] sm:$0xf]
      %v2096 = vld [vmem:[%s470 + $0xb0] sm:$0xf]
      %v2097 = vld [vmem:[%s470 + $0xb4] sm:$0xf]
      %v2098 = vld [vmem:[%s470 + $0xb8] sm:$0xf]
      %v2099 = vld [vmem:[%s470 + $0xbc] sm:$0xf]
      %v2100 = vld [vmem:[%s470 + $0xc0] sm:$0xf]
      %v2101 = vld [vmem:[%s470 + $0xc4] sm:$0xf]
      %v2102 = vld [vmem:[%s470 + $0xc8] sm:$0xf]
      %v2103 = vld [vmem:[%s470 + $0xcc] sm:$0xf]
      %v2104 = vld [vmem:[%s470 + $0xd0] sm:$0xf]
      %v2105 = vld [vmem:[%s470 + $0xd4] sm:$0xf]
      %v2106 = vld [vmem:[%s470 + $0xd8] sm:$0xf]
      %v2107 = vld [vmem:[%s470 + $0xdc] sm:$0xf]
      %v2108 = vld [vmem:[%s470 + $0xe0] sm:$0xf]
      %v2109 = vld [vmem:[%s470 + $0xe4] sm:$0xf]
      %v2110 = vld [vmem:[%s470 + $0xe8] sm:$0xf]
      %v2111 = vld [vmem:[%s470 + $0xec] sm:$0xf]
      %v2112 = vld [vmem:[%s470 + $0xf0] sm:$0xf]
      %v2113 = vld [vmem:[%s470 + $0xf4] sm:$0xf]
      %v2114 = vld [vmem:[%s470 + $0xf8] sm:$0xf]
      %v2115 = vld [vmem:[%s470 + $0xfc] sm:$0xf]
      %v2116 = vld [vmem:[%s475] sm:$0xff]
      %v2117 = vld [vmem:[%s475 + $0x8] sm:$0xff]
      %v2118 = vld [vmem:[%s475 + $0x10] sm:$0xff]
      %v2119 = vld [vmem:[%s475 + $0x18] sm:$0xff]
      %v2184 = vunpack.c.l.b16 %v2052
      %v2185 = vunpack.c.l.b16 %v2053
      %v2186 = vunpack.c.l.b16 %v2054
      %v2187 = vunpack.c.l.b16 %v2055
      %v2188 = vunpack.c.l.b16 %v2056
      %v2189 = vunpack.c.l.b16 %v2057
      %v2190 = vunpack.c.l.b16 %v2058
      %v2191 = vunpack.c.l.b16 %v2059
      %v2192 = vunpack.c.l.b16 %v2060
      %v2193 = vunpack.c.l.b16 %v2061
      %v2194 = vunpack.c.l.b16 %v2062
      %v2195 = vunpack.c.l.b16 %v2063
      %v2196 = vunpack.c.l.b16 %v2064
      %v2197 = vunpack.c.l.b16 %v2065
      %v2198 = vunpack.c.l.b16 %v2066
      %v2199 = vunpack.c.l.b16 %v2067
      %v2200 = vunpack.c.l.b16 %v2068
      %v2201 = vunpack.c.l.b16 %v2069
      %v2202 = vunpack.c.l.b16 %v2070
      %v2203 = vunpack.c.l.b16 %v2071
      %v2204 = vunpack.c.l.b16 %v2072
      %v2205 = vunpack.c.l.b16 %v2073
      %v2206 = vunpack.c.l.b16 %v2074
      %v2207 = vunpack.c.l.b16 %v2075
      %v2208 = vunpack.c.l.b16 %v2076
      %v2209 = vunpack.c.l.b16 %v2077
      %v2210 = vunpack.c.l.b16 %v2078
      %v2211 = vunpack.c.l.b16 %v2079
      %v2212 = vunpack.c.l.b16 %v2080
      %v2213 = vunpack.c.l.b16 %v2081
      %v2214 = vunpack.c.l.b16 %v2082
      %v2215 = vunpack.c.l.b16 %v2083
      %v2216 = vunpack.c.l.b16 %v2084
      %v2217 = vunpack.c.l.b16 %v2085
      %v2218 = vunpack.c.l.b16 %v2086
      %v2219 = vunpack.c.l.b16 %v2087
      %v2220 = vunpack.c.l.b16 %v2088
      %v2221 = vunpack.c.l.b16 %v2089
      %v2222 = vunpack.c.l.b16 %v2090
      %v2223 = vunpack.c.l.b16 %v2091
      %v2224 = vunpack.c.l.b16 %v2092
      %v2225 = vunpack.c.l.b16 %v2093
      %v2226 = vunpack.c.l.b16 %v2094
      %v2227 = vunpack.c.l.b16 %v2095
      %v2228 = vunpack.c.l.b16 %v2096
      %v2229 = vunpack.c.l.b16 %v2097
      %v2230 = vunpack.c.l.b16 %v2098
      %v2231 = vunpack.c.l.b16 %v2099
      %v2232 = vunpack.c.l.b16 %v2100
      %v2233 = vunpack.c.l.b16 %v2101
      %v2234 = vunpack.c.l.b16 %v2102
      %v2235 = vunpack.c.l.b16 %v2103
      %v2236 = vunpack.c.l.b16 %v2104
      %v2237 = vunpack.c.l.b16 %v2105
      %v2238 = vunpack.c.l.b16 %v2106
      %v2239 = vunpack.c.l.b16 %v2107
      %v2240 = vunpack.c.l.b16 %v2108
      %v2241 = vunpack.c.l.b16 %v2109
      %v2242 = vunpack.c.l.b16 %v2110
      %v2243 = vunpack.c.l.b16 %v2111
      %v2244 = vunpack.c.l.b16 %v2112
      %v2245 = vunpack.c.l.b16 %v2113
      %v2246 = vunpack.c.l.b16 %v2114
      %v2247 = vunpack.c.l.b16 %v2115
      %v2248 = vpack.c.b16 %v2185, %v2184
      %v2249 = vpack.c.b16 %v2187, %v2186
      %v2250 = vpack.c.b16 %v2189, %v2188
      %v2251 = vpack.c.b16 %v2191, %v2190
      %v2252 = vpack.c.b16 %v2193, %v2192
      %v2253 = vpack.c.b16 %v2195, %v2194
      %v2254 = vpack.c.b16 %v2197, %v2196
      %v2255 = vpack.c.b16 %v2199, %v2198
      %v2256 = vpack.c.b16 %v2201, %v2200
      %v2257 = vpack.c.b16 %v2203, %v2202
      %v2258 = vpack.c.b16 %v2205, %v2204
      %v2259 = vpack.c.b16 %v2207, %v2206
      %v2260 = vpack.c.b16 %v2209, %v2208
      %v2261 = vpack.c.b16 %v2211, %v2210
      %v2262 = vpack.c.b16 %v2213, %v2212
      %v2263 = vpack.c.b16 %v2215, %v2214
      %v2264 = vpack.c.b16 %v2217, %v2216
      %v2265 = vpack.c.b16 %v2219, %v2218
      %v2266 = vpack.c.b16 %v2221, %v2220
      %v2267 = vpack.c.b16 %v2223, %v2222
      %v2268 = vpack.c.b16 %v2225, %v2224
      %v2269 = vpack.c.b16 %v2227, %v2226
      %v2270 = vpack.c.b16 %v2229, %v2228
      %v2271 = vpack.c.b16 %v2231, %v2230
      %v2272 = vpack.c.b16 %v2233, %v2232
      %v2273 = vpack.c.b16 %v2235, %v2234
      %v2274 = vpack.c.b16 %v2237, %v2236
      %v2275 = vpack.c.b16 %v2239, %v2238
      %v2276 = vpack.c.b16 %v2241, %v2240
      %v2277 = vpack.c.b16 %v2243, %v2242
      %v2278 = vpack.c.b16 %v2245, %v2244
      %v2279 = vpack.c.b16 %v2247, %v2246
      %2312 = vmatprep.subr.bf16.mxu0 0
      %2313 = vmatpush1.bf16.msra.mxu0 %v2255
      %2314 = vmatprep.subr.bf16.mxu0 0
      %2315 = vmatpush1.bf16.msra.mxu0 %v2254
      %2316 = vmatprep.subr.bf16.mxu0 0
      %2317 = vmatpush1.bf16.msra.mxu0 %v2253
      %2318 = vmatprep.subr.bf16.mxu0 0
      %2319 = vmatpush1.bf16.msra.mxu0 %v2252
      %2320 = vmatprep.subr.bf16.mxu0 0
      %2321 = vmatpush1.bf16.msra.mxu0 %v2251
      %2322 = vmatprep.subr.bf16.mxu0 0
      %2323 = vmatpush1.bf16.msra.mxu0 %v2250
      %2324 = vmatprep.subr.bf16.mxu0 0
      %2325 = vmatpush1.bf16.msra.mxu0 %v2249
      %2326 = vmatprep.subr.bf16.mxu0 0
      %2327 = vmatpush1.bf16.msra.mxu0 %v2248
      %2328 = vmatprep.subr.bf16.mxu0 0
      %2329 = vmatpush2.bf16.msra.mxu0 %v2263
      %2330 = vmatprep.subr.bf16.mxu0 0
      %2331 = vmatpush2.bf16.msra.mxu0 %v2262
      %2332 = vmatprep.subr.bf16.mxu0 0
      %2333 = vmatpush2.bf16.msra.mxu0 %v2261
      %2334 = vmatprep.subr.bf16.mxu0 0
      %2335 = vmatpush2.bf16.msra.mxu0 %v2260
      %2336 = vmatprep.subr.bf16.mxu0 0
      %2337 = vmatpush2.bf16.msra.mxu0 %v2259
      %2338 = vmatprep.subr.bf16.mxu0 0
      %2339 = vmatpush2.bf16.msra.mxu0 %v2258
      %2340 = vmatprep.subr.bf16.mxu0 0
      %2341 = vmatpush2.bf16.msra.mxu0 %v2257
      %2342 = vmatprep.subr.bf16.mxu0 0
      %2343 = vmatpush2.bf16.msra.mxu0 %v2256
      %2344 = vmatprep.mubr.bf16.mxu0 %v2045
      %2345 = vmatmul.mubr.bf16.gmra.mxu0 %v2044
      %v2346 = vpop.f32.mrf.mxu0
      %v2347 = vadd.f32 %v2116, %v2346
      %v2348 = vpop.f32.mrf.mxu0
      %v2349 = vpop.f32.mrf.mxu0
      %v2350 = vadd.f32 %v2117, %v2349
      %v2351 = vpop.f32.mrf.mxu0
      %2352 = vmatprep.mubr.bf16.mxu0 %v2049
      %2353 = vmatmul.mubr.bf16.gmra.mxu0 %v2048
      %v2354 = vpop.f32.mrf.mxu0
      %v2355 = vadd.f32 %v2118, %v2354
      %v2356 = vpop.f32.mrf.mxu0
      %v2357 = vpop.f32.mrf.mxu0
      %v2358 = vadd.f32 %v2119, %v2357
      %v2359 = vpop.f32.mrf.mxu0
      %2360 = vdwg.mxu0
      %2361 = vmatprep.subr.bf16.mxu0 0
      %2362 = vmatpush1.bf16.msra.mxu0 %v2271
      %2363 = vmatprep.subr.bf16.mxu0 0
      %2364 = vmatpush1.bf16.msra.mxu0 %v2270
      %2365 = vmatprep.subr.bf16.mxu0 0
      %2366 = vmatpush1.bf16.msra.mxu0 %v2269
      %2367 = vmatprep.subr.bf16.mxu0 0
      %2368 = vmatpush1.bf16.msra.mxu0 %v2268
      %2369 = vmatprep.subr.bf16.mxu0 0
      %2370 = vmatpush1.bf16.msra.mxu0 %v2267
      %2371 = vmatprep.subr.bf16.mxu0 0
      %2372 = vmatpush1.bf16.msra.mxu0 %v2266
      %2373 = vmatprep.subr.bf16.mxu0 0
      %2374 = vmatpush1.bf16.msra.mxu0 %v2265
      %2375 = vmatprep.subr.bf16.mxu0 0
      %2376 = vmatpush1.bf16.msra.mxu0 %v2264
      %2377 = vmatprep.subr.bf16.mxu0 0
      %2378 = vmatpush2.bf16.msra.mxu0 %v2279
      %2379 = vmatprep.subr.bf16.mxu0 0
      %2380 = vmatpush2.bf16.msra.mxu0 %v2278
      %2381 = vmatprep.subr.bf16.mxu0 0
      %2382 = vmatpush2.bf16.msra.mxu0 %v2277
      %2383 = vmatprep.subr.bf16.mxu0 0
      %2384 = vmatpush2.bf16.msra.mxu0 %v2276
      %2385 = vmatprep.subr.bf16.mxu0 0
      %2386 = vmatpush2.bf16.msra.mxu0 %v2275
      %2387 = vmatprep.subr.bf16.mxu0 0
      %2388 = vmatpush2.bf16.msra.mxu0 %v2274
      %2389 = vmatprep.subr.bf16.mxu0 0
      %2390 = vmatpush2.bf16.msra.mxu0 %v2273
      %2391 = vmatprep.subr.bf16.mxu0 0
      %2392 = vmatpush2.bf16.msra.mxu0 %v2272
      %2393 = vmatprep.mubr.bf16.mxu0 %v2047
      %2394 = vmatmul.mubr.bf16.gmra.mxu0 %v2046
      %v2395 = vpop.f32.mrf.mxu0
      %v2396 = vadd.f32 %v2347, %v2395
      %v2397 = vpop.f32.mrf.mxu0
      %v2398 = vpop.f32.mrf.mxu0
      %v2399 = vadd.f32 %v2350, %v2398
      %v2400 = vpop.f32.mrf.mxu0
      %2401 = vmatprep.mubr.bf16.mxu0 %v2051
      %2402 = vmatmul.mubr.bf16.gmra.mxu0 %v2050
      %v2403 = vpop.f32.mrf.mxu0
      %v2404 = vadd.f32 %v2355, %v2403
      %v2405 = vpop.f32.mrf.mxu0
      %v2406 = vpop.f32.mrf.mxu0
      %v2407 = vadd.f32 %v2358, %v2406
      %v2408 = vpop.f32.mrf.mxu0
      %2409 = vdwg.mxu0
      %2410 = vst [vmem:[%s480] sm:$0xff] %v2396
      %2411 = vst [vmem:[%s480 + $0x8] sm:$0xff] %v2399
      %2412 = vst [vmem:[%s480 + $0x10] sm:$0xff] %v2404
      %2413 = vst [vmem:[%s480 + $0x18] sm:$0xff] %v2407
      %p2414 = scmp.lt.s32.totalorder %s20, 1
      %s2415 = scalar_select %p2414, %s20, 1
      %s2416 = smul.addr %s2415, 4
      %s2417 = smul.addr %s2416, 8
      %s2418 = scalar_lea.vmem %s9, %s2417
      // Predicated region
      $region57: #{forward.1} parent=55 // pred_check
        %p2419 = pneg %p272
      $region58: #{forward.1} parent=55 // pred_check_branch
        %2421 = sbr.rel (%p2419) target = $region60
      $region59: #{forward.1} parent=55 // pred_region
        _
      $region60: #{forward.1} parent=55 // pred_fallthru
        _
    $region56: #{forward.1} parent=5 // pred_fallthru
      _
    %p2422 = scmp.le.s32.totalorder 2, %s15
    // Predicated region
    $region61: #{forward.1} parent=5 // pred_check
      %p2423 = pneg %p2422
    $region62: #{forward.1} parent=5 // pred_check_branch
      %2425 = sbr.rel (%p2423) target = $region64
    $region63: #{forward.1} parent=5 // pred_region
      %s2426 = ssub.s32 %s15, 2
      // Predicated region
      $region65: #{forward.1} parent=63 // pred_check
        %p2427 = pneg %p278
      $region66: #{forward.1} parent=63 // pred_check_branch
        %2429 = sbr.rel (%p2427) target = $region68
      $region67: #{forward.1} parent=63 // pred_region
        %p2430 = scmp.lt.s32.totalorder %s21, 1
        %s2431 = scalar_select %p2430, %s21, 1
        %s2432 = smul.addr %s2431, 4
        %s2433 = smul.addr %s2432, 8
        %s2434 = scalar_lea.vmem %s9, %s2433
      $region68: #{forward.1} parent=63 // pred_fallthru
        _
    $region64: #{forward.1} parent=5 // pred_fallthru
      _
  $region6: #{forward.1} parent=0 // loop_footer
    %s19 = sadd.s32 1, %s15
  $region7: #{forward.1} parent=0 // loop_footer_branch
    %14 = sbr.rel target = $region3
  $region8: #{forward.1} parent=0 // loop_exit
    _

</llo_original>
